<compile_context>
chip_gen: v7x
topology: tpu7x:2x2x1
jax: 0.10.0
libtpu: 0.0.40
codegen_flags: <defaults>
</compile_context>

<pallas_src>
import jax
import jax.numpy as jnp
from jax.experimental import pallas as pl
from jax.experimental.pallas import tpu as pltpu


def _cheb_conv_kernel(x_ref, tkt_ref, theta_ref, o_ref):
    # x_ref:     (1, F_in, N*bt)   cols ordered (node m, local (b,t) index j)
    # tkt_ref:   (N, K*N)          tkt[n, k*N+m] = T_k^T[n, m]           (resident)
    # theta_ref: (K*F_out, F_in)   theta_t[k*F_out+o, f] = Theta_k[f, o] (resident)
    # o_ref:     (1, N, F_out*bt)  cols ordered (o, j)
    n, kn = tkt_ref.shape
    kfo, _ = theta_ref.shape
    k = kn // n
    f_out = kfo // k
    nbt = x_ref.shape[2]
    bt = nbt // n

    x2 = x_ref[0]                                                          # (F_in, N*bt)
    # Stage 1: K-fused channel transform, lane-dense output (lane = N*bt).
    yt = jnp.dot(theta_ref[...], x2, preferred_element_type=jnp.float32)   # (K*F_out, N*bt)
    # Single explicit relayout (k, o, m, j) -> (k, m, o, j); minor (lane) dim j preserved.
    r4 = yt.astype(x2.dtype).reshape(k, f_out, n, bt)
    r = jnp.transpose(r4, (0, 2, 1, 3)).reshape(kn, f_out * bt)            # (K*N, F_out*bt)
    # Stage 2: K-fused graph mixing; contraction depth K*N, lane dim F_out*bt.
    acc = jnp.dot(tkt_ref[...], r, preferred_element_type=jnp.float32)     # (N, F_out*bt)
    o_ref[0] = jnp.maximum(acc, 0.0).astype(o_ref.dtype)


def _vmem_limit_bytes():
    """Generation-aware VMEM cap: ~75% of physical, floor 32 MiB, ceiling 100 MiB."""
    cap = None
    try:
        info = pltpu.get_tpu_info()
        cap = getattr(info, "vmem_capacity_bytes", None)
    except Exception:  # noqa: BLE001
        cap = None
    if not cap:
        cap = 64 * 1024 * 1024  # conservative fallback (v7x physical VMEM)
    return int(min(max(cap * 3 // 4, 32 * 1024 * 1024), 100 * 1024 * 1024))


def _pick_bt_tile(BT, N, F_in, F_out, K, itemsize, vmem_budget):
    """Pick a divisor of B*T so the output slab is lane-dense and VMEM stays bounded."""
    divisors = [d for d in range(1, BT + 1) if BT % d == 0]

    def step_bytes(d):
        xb = 2 * F_in * N * d * itemsize          # x block (double-buffered)
        ob = 2 * N * F_out * d * 4                # out block, f32 (double-buffered)
        yt = K * F_out * N * d * 4                # stage-1 f32 result
        rr = K * N * F_out * d * itemsize         # relayouted graph-matmul RHS
        ac = N * F_out * d * 4                    # stage-2 f32 accumulator
        return int(1.5 * (xb + ob + yt + rr + ac))  # fudge for relayout temporaries

    resident = 2 * (K * N * N + K * F_in * F_out) * itemsize
    fitting = [d for d in divisors if resident + step_bytes(d) <= vmem_budget] or [1]
    dense = [d for d in fitting if d * F_out >= 128]   # >=128-lane output slab
    if dense:
        deep = [d for d in dense if BT // d >= 8]       # keep some steps for pipelining
        return deep[-1] if deep else dense[0]
    return fitting[-1]


def _build_call(num_tiles, N, K, F_in, F_out, bt_tile, itemsize, out_dtype,
                vmem_limit, buffered_resident):
    resident_kwargs = dict(pipeline_mode=pl.Buffered(1)) if buffered_resident else {}
    BT = num_tiles * bt_tile
    cost = pl.CostEstimate(
        flops=2 * K * BT * (N * N * F_out + N * F_in * F_out),
        transcendentals=0,
        bytes_accessed=(BT * F_in * N * itemsize          # x
                        + K * N * N * itemsize            # T_k^T
                        + K * F_in * F_out * itemsize     # Theta
                        + BT * N * F_out * 4),            # out (f32)
    )
    return pl.pallas_call(
        _cheb_conv_kernel,
        out_shape=jax.ShapeDtypeStruct((num_tiles, N, F_out * bt_tile), out_dtype),
        grid_spec=pltpu.PrefetchScalarGridSpec(
            num_scalar_prefetch=0,
            grid=(num_tiles,),                            # tiles of the flattened (b, t) axis
            in_specs=[
                pl.BlockSpec((1, F_in, N * bt_tile), lambda i: (i, 0, 0)),
                pl.BlockSpec((N, K * N), lambda i: (0, 0), **resident_kwargs),
                pl.BlockSpec((K * F_out, F_in), lambda i: (0, 0), **resident_kwargs),
            ],
            out_specs=pl.BlockSpec((1, N, F_out * bt_tile), lambda i: (i, 0, 0)),
        ),
        compiler_params=pltpu.CompilerParams(
            dimension_semantics=("parallel",),            # (b, t) tiles are independent
            vmem_limit_bytes=vmem_limit,
        ),
        cost_estimate=cost,
    )


def cheb_conv_pallas(x, cheb_polynomials, theta, *, compute_dtype=jnp.bfloat16):
    """
    x:                 (B, N, F_in, T)   float32
    cheb_polynomials:  (K, N, N)         float32
    theta:             (K, F_in, F_out)  float32
    returns:           (B, N, F_out, T)  float32 (ReLU applied)
    """
    B, N, F_in, T = x.shape
    K = cheb_polynomials.shape[0]
    F_out = theta.shape[-1]
    BT = B * T

    cd = jnp.dtype(compute_dtype)
    itemsize = cd.itemsize

    vmem_limit = _vmem_limit_bytes()
    bt_tile = _pick_bt_tile(BT, N, F_in, F_out, K, itemsize, int(vmem_limit * 0.6))
    num_tiles = BT // bt_tile

    # ---- wrapper-side layout plumbing (one pass each; no compute hoisted) ----
    # Graph-matmul LHS, K-fused: tkt_wide[n, k*N + m] = T_k^T[n, m] = cheb[k, m, n].
    tkt_wide = jnp.transpose(cheb_polynomials, (2, 0, 1)).reshape(N, K * N).astype(cd)
    # Channel-matmul LHS, K-fused (transposed): theta_t[k*F_out + o, f] = Theta_k[f, o].
    theta_t = jnp.transpose(theta, (0, 2, 1)).reshape(K * F_out, F_in).astype(cd)
    # x_tiles[tile, f, m*bt_tile + j] = x[b, m, f, t]  with  b*T + t = tile*bt_tile + j.
    x_tiles = (
        jnp.transpose(x, (2, 1, 0, 3))                    # (F_in, N, B, T)
        .reshape(F_in, N, num_tiles, bt_tile)
        .transpose(2, 0, 1, 3)                            # (tiles, F_in, N, bt_tile)
        .reshape(num_tiles, F_in, N * bt_tile)
        .astype(cd)
    )

    out_flat = None
    last_err = None
    # Buffered(1) halves resident-operand VMEM (v7x); fall back if unsupported.
    for buffered in (True, False):
        try:
            call = _build_call(num_tiles, N, K, F_in, F_out, bt_tile, itemsize,
                               x.dtype, vmem_limit, buffered)
            out_flat = call(x_tiles, tkt_wide, theta_t)
            break
        except Exception as e:  # noqa: BLE001
            last_err = e
    if out_flat is None:
        raise last_err

    # (tiles, N, F_out*bt_tile) -> (B, N, F_out, T): pure layout plumbing.
    return (
        out_flat.reshape(num_tiles, N, F_out, bt_tile)
        .transpose(0, 3, 1, 2)                            # (tiles, bt_tile, N, F_out)
        .reshape(B, T, N, F_out)
        .transpose(0, 2, 3, 1)                            # (B, N, F_out, T)
    )


def _cheb_conv_ref(x, cheb_polynomials, theta):
    """Pure-JAX reference matching the PyTorch forward (contract T_k over its first index)."""
    out = jnp.einsum("kmn,bmft,kfo->bnot", cheb_polynomials, x, theta)
    return jax.nn.relu(out)


def _build_cheb_polynomials(key, N, K):
    """Deterministically build K Chebyshev polynomials of a scaled Laplacian."""
    a = jax.random.uniform(key, (N, N), dtype=jnp.float32)
    adj = (a + a.T) * 0.5
    adj = adj * (1.0 - jnp.eye(N, dtype=jnp.float32))
    deg = jnp.sum(adj, axis=1)
    d_inv_sqrt = 1.0 / jnp.sqrt(deg + 1e-6)
    lap = jnp.eye(N, dtype=jnp.float32) - (d_inv_sqrt[:, None] * adj * d_inv_sqrt[None, :])
    l_tilde = lap - jnp.eye(N, dtype=jnp.float32)  # scale to roughly [-1, 1]

    polys = [jnp.eye(N, dtype=jnp.float32), l_tilde]
    for _ in range(2, K):
        polys.append(2.0 * l_tilde @ polys[-1] - polys[-2])
    return jnp.stack(polys[:K], axis=0)  # (K, N, N)


if __name__ == "__main__":
    # Small shapes consistent with the module: x is (batch, N, F_in, T)
    B, N, F_in, F_out, T, K = 2, 16, 4, 8, 8, 3

    key = jax.random.PRNGKey(0)
    k_x, k_adj, k_theta = jax.random.split(key, 3)

    x = jax.random.normal(k_x, (B, N, F_in, T), dtype=jnp.float32)
    cheb_polys = _build_cheb_polynomials(k_adj, N, K)                          # (K, N, N)
    theta = 0.1 * jax.random.normal(k_theta, (K, F_in, F_out), jnp.float32)    # (K, F_in, F_out)

    ref = _cheb_conv_ref(x, cheb_polys, theta)

    # Default bf16-compute path (MXU-native; f32 accumulation, f32 output).
    out_bf16 = jax.block_until_ready(cheb_conv_pallas(x, cheb_polys, theta))
    assert out_bf16.shape == (B, N, F_out, T)
    assert jnp.allclose(out_bf16, ref, atol=5e-2, rtol=5e-2), "bf16 mismatch vs reference"

    # Full f32-compute path: tight numerical check of the restructured math.
    out_f32 = jax.block_until_ready(
        cheb_conv_pallas(x, cheb_polys, theta, compute_dtype=jnp.float32)
    )
    assert jnp.allclose(out_f32, ref, atol=1e-4, rtol=1e-4), "f32 mismatch vs reference"

    print("KERNEL_OK")
</pallas_src>

<mosaic_0001>
module attributes {stable_mosaic.version = 11 : i64} {
  func.func @_cheb_conv_kernel(%arg0: i32, %arg1: memref<1x4x256xbf16, #tpu.memory_space<vmem>>, %arg2: memref<16x48xbf16, #tpu.memory_space<vmem>>, %arg3: memref<24x4xbf16, #tpu.memory_space<vmem>>, %arg4: memref<1x16x128xf32, #tpu.memory_space<vmem>>) attributes {dimension_semantics = [#tpu.dimension_semantics<parallel>], iteration_bounds = array<i64: 1>, scalar_prefetch = 0 : i64, scratch_operands = 0 : i64, tpu.core_type = #tpu.core_type<tc>, window_params = [{transform_indices = @transform_0, window_bounds = array<i64: 1, 4, 256>}, {pipeline_mode = #tpu.pipeline_mode<synchronous>, transform_indices = @transform_1, window_bounds = array<i64: 16, 48>}, {pipeline_mode = #tpu.pipeline_mode<synchronous>, transform_indices = @transform_2, window_bounds = array<i64: 24, 4>}, {transform_indices = @transform_3, window_bounds = array<i64: 1, 16, 128>}]} {
    %c0 = arith.constant 0 : index
    %c0_0 = arith.constant 0 : index
    %c0_1 = arith.constant 0 : index
    %0 = vector.load %arg1[%c0, %c0_0, %c0_1] : memref<1x4x256xbf16, #tpu.memory_space<vmem>>, vector<1x4x256xbf16>
    %1 = vector.shape_cast %0 : vector<1x4x256xbf16> to vector<4x256xbf16>
    %c0_2 = arith.constant 0 : index
    %c0_3 = arith.constant 0 : index
    %2 = vector.load %arg3[%c0_2, %c0_3] : memref<24x4xbf16, #tpu.memory_space<vmem>>, vector<24x4xbf16>
    %cst = arith.constant dense<0.000000e+00> : vector<24x256xf32>
    %3 = tpu.matmul %2, %1, %cst {dimension_numbers = #tpu.dot_dimension_numbers<[1], [0], [0], [1], [0, 0, 1, 1], [], []>} : vector<24x4xbf16>, vector<4x256xbf16>, vector<24x256xf32> -> vector<24x256xf32>
    %4 = arith.truncf %3 : vector<24x256xf32> to vector<24x256xbf16>
    %5 = vector.shape_cast %4 : vector<24x256xbf16> to vector<3x8x16x16xbf16>
    %6 = tpu.transpose %5, [0, 2, 1, 3] : vector<3x8x16x16xbf16> -> vector<3x16x8x16xbf16>
    %7 = vector.shape_cast %6 : vector<3x16x8x16xbf16> to vector<48x128xbf16>
    %c0_4 = arith.constant 0 : index
    %c0_5 = arith.constant 0 : index
    %8 = vector.load %arg2[%c0_4, %c0_5] : memref<16x48xbf16, #tpu.memory_space<vmem>>, vector<16x48xbf16>
    %cst_6 = arith.constant dense<0.000000e+00> : vector<16x128xf32>
    %9 = tpu.matmul %8, %7, %cst_6 {dimension_numbers = #tpu.dot_dimension_numbers<[1], [0], [0], [1], [0, 0, 1, 1], [], []>} : vector<16x48xbf16>, vector<48x128xbf16>, vector<16x128xf32> -> vector<16x128xf32>
    %cst_7 = arith.constant 0.000000e+00 : f32
    %10 = vector.broadcast %cst_7 : f32 to vector<16x128xf32>
    %11 = arith.maximumf %9, %10 : vector<16x128xf32>
    %c0_8 = arith.constant 0 : index
    %c0_9 = arith.constant 0 : index
    %c0_10 = arith.constant 0 : index
    %12 = vector.load %arg4[%c0_8, %c0_9, %c0_10] : memref<1x16x128xf32, #tpu.memory_space<vmem>>, vector<1x16x128xf32>
    %13 = vector.shape_cast %12 : vector<1x16x128xf32> to vector<16x128xf32>
    %14 = vector.shape_cast %11 : vector<16x128xf32> to vector<1x16x128xf32>
    tpu.vector_store %arg4[%c0_8, %c0_9, %c0_10], %14 {strides = array<i32>} : memref<1x16x128xf32, #tpu.memory_space<vmem>>, vector<1x16x128xf32>,
    return
  }
  func.func @transform_0(%arg0: i32) -> (i32, i32, i32) {
    %c0_i32 = arith.constant 0 : i32
    %c0_i32_0 = arith.constant 0 : i32
    %c0_i32_1 = arith.constant 0 : i32
    return %arg0, %c0_i32, %c0_i32_0 : i32, i32, i32
  }
  func.func @transform_1(%arg0: i32) -> (i32, i32) {
    %c0_i32 = arith.constant 0 : i32
    %c0_i32_0 = arith.constant 0 : i32
    %c0_i32_1 = arith.constant 0 : i32
    return %c0_i32, %c0_i32_0 : i32, i32
  }
  func.func @transform_2(%arg0: i32) -> (i32, i32) {
    %c0_i32 = arith.constant 0 : i32
    %c0_i32_0 = arith.constant 0 : i32
    %c0_i32_1 = arith.constant 0 : i32
    return %c0_i32, %c0_i32_0 : i32, i32
  }
  func.func @transform_3(%arg0: i32) -> (i32, i32, i32) {
    %c0_i32 = arith.constant 0 : i32
    %c0_i32_0 = arith.constant 0 : i32
    %c0_i32_1 = arith.constant 0 : i32
    return %arg0, %c0_i32, %c0_i32_0 : i32, i32, i32
  }
}

module attributes {stable_mosaic.version = 11 : i64} {
  func.func @_cheb_conv_kernel(%arg0: i32, %arg1: memref<1x4x256xbf16, #tpu.memory_space<vmem>>, %arg2: memref<16x48xbf16, #tpu.memory_space<vmem>>, %arg3: memref<24x4xbf16, #tpu.memory_space<vmem>>, %arg4: memref<1x16x128xf32, #tpu.memory_space<vmem>>) attributes {dimension_semantics = [#tpu.dimension_semantics<parallel>], iteration_bounds = array<i64: 1>, scalar_prefetch = 0 : i64, scratch_operands = 0 : i64, tpu.core_type = #tpu.core_type<tc>, window_params = [{transform_indices = @transform_0, window_bounds = array<i64: 1, 4, 256>}, {pipeline_mode = #tpu.pipeline_mode<synchronous>, transform_indices = @transform_1, window_bounds = array<i64: 16, 48>}, {pipeline_mode = #tpu.pipeline_mode<synchronous>, transform_indices = @transform_2, window_bounds = array<i64: 24, 4>}, {transform_indices = @transform_3, window_bounds = array<i64: 1, 16, 128>}]} {
    %c0 = arith.constant 0 : index
    %c0_0 = arith.constant 0 : index
    %c0_1 = arith.constant 0 : index
    %0 = vector.load %arg1[%c0, %c0_0, %c0_1] : memref<1x4x256xbf16, #tpu.memory_space<vmem>>, vector<1x4x256xbf16>
    %1 = vector.shape_cast %0 : vector<1x4x256xbf16> to vector<4x256xbf16>
    %c0_2 = arith.constant 0 : index
    %c0_3 = arith.constant 0 : index
    %2 = vector.load %arg3[%c0_2, %c0_3] : memref<24x4xbf16, #tpu.memory_space<vmem>>, vector<24x4xbf16>
    %cst = arith.constant dense<0.000000e+00> : vector<24x256xf32>
    %3 = tpu.matmul %2, %1, %cst {dimension_numbers = #tpu.dot_dimension_numbers<[1], [0], [0], [1], [0, 0, 1, 1], [], []>} : vector<24x4xbf16>, vector<4x256xbf16>, vector<24x256xf32> -> vector<24x256xf32>
    %4 = arith.truncf %3 : vector<24x256xf32> to vector<24x256xbf16>
    %5 = vector.shape_cast %4 : vector<24x256xbf16> to vector<3x8x16x16xbf16>
    %6 = tpu.transpose %5, [0, 2, 1, 3] : vector<3x8x16x16xbf16> -> vector<3x16x8x16xbf16>
    %7 = vector.shape_cast %6 : vector<3x16x8x16xbf16> to vector<48x128xbf16>
    %c0_4 = arith.constant 0 : index
    %c0_5 = arith.constant 0 : index
    %8 = vector.load %arg2[%c0_4, %c0_5] : memref<16x48xbf16, #tpu.memory_space<vmem>>, vector<16x48xbf16>
    %cst_6 = arith.constant dense<0.000000e+00> : vector<16x128xf32>
    %9 = tpu.matmul %8, %7, %cst_6 {dimension_numbers = #tpu.dot_dimension_numbers<[1], [0], [0], [1], [0, 0, 1, 1], [], []>} : vector<16x48xbf16>, vector<48x128xbf16>, vector<16x128xf32> -> vector<16x128xf32>
    %cst_7 = arith.constant 0.000000e+00 : f32
    %10 = vector.broadcast %cst_7 : f32 to vector<16x128xf32>
    %11 = arith.maximumf %9, %10 : vector<16x128xf32>
    %c0_8 = arith.constant 0 : index
    %c0_9 = arith.constant 0 : index
    %c0_10 = arith.constant 0 : index
    %12 = vector.load %arg4[%c0_8, %c0_9, %c0_10] : memref<1x16x128xf32, #tpu.memory_space<vmem>>, vector<1x16x128xf32>
    %13 = vector.shape_cast %12 : vector<1x16x128xf32> to vector<16x128xf32>
    %14 = vector.shape_cast %11 : vector<16x128xf32> to vector<1x16x128xf32>
    tpu.vector_store %arg4[%c0_8, %c0_9, %c0_10], %14 {strides = array<i32>} : memref<1x16x128xf32, #tpu.memory_space<vmem>>, vector<1x16x128xf32>,
    return
  }
  func.func @transform_0(%arg0: i32) -> (i32, i32, i32) {
    %c0_i32 = arith.constant 0 : i32
    %c0_i32_0 = arith.constant 0 : i32
    %c0_i32_1 = arith.constant 0 : i32
    return %arg0, %c0_i32, %c0_i32_0 : i32, i32, i32
  }
  func.func @transform_1(%arg0: i32) -> (i32, i32) {
    %c0_i32 = arith.constant 0 : i32
    %c0_i32_0 = arith.constant 0 : i32
    %c0_i32_1 = arith.constant 0 : i32
    return %c0_i32, %c0_i32_0 : i32, i32
  }
  func.func @transform_2(%arg0: i32) -> (i32, i32) {
    %c0_i32 = arith.constant 0 : i32
    %c0_i32_0 = arith.constant 0 : i32
    %c0_i32_1 = arith.constant 0 : i32
    return %c0_i32, %c0_i32_0 : i32, i32
  }
  func.func @transform_3(%arg0: i32) -> (i32, i32, i32) {
    %c0_i32 = arith.constant 0 : i32
    %c0_i32_0 = arith.constant 0 : i32
    %c0_i32_1 = arith.constant 0 : i32
    return %arg0, %c0_i32, %c0_i32_0 : i32, i32, i32
  }
}

</mosaic_0001>

<llo_original>
// kernel: tpu_custom_call.1
$region0: #{tpu_custom_call.1}
  #allocation0 [shape = 'u32[]', space=smem, size = 0x4, offset = 0x4, fixed_abs, tag = 'smem constant byte address 0x4 - core index']
  #allocation1 [shape = 'u32[144,128]{1,0:T(1,128)}', space=vmem, size = 0x12000, scoped, tag = 'internal scratch']
  %s0 = inlined_call_operand.vmem [shape: bf16[1,4,256], index: 0, kind: input, shape index: {}]
  %s1 = inlined_call_operand.vmem [shape: bf16[16,48], index: 1, kind: input, shape index: {}]
  %s2 = inlined_call_operand.vmem [shape: bf16[24,4], index: 2, kind: input, shape index: {}]
  %s3 = inlined_call_operand.hbm [shape: f32[1,16,128], index: 3, kind: output, shape index: {}]
  %s4 = sld [smem:[#allocation0]]
  $region22: #{tpu_custom_call.1} parent=0
    _
  %s6 = ssub.s32 1, %s4
  %s7 = scalar_select 0, %s6, %s4
  $region1: #{tpu_custom_call.1} parent=0
    #allocation2 [shape = 'u8[8192]{0}', space=vmem, size = 0x2000, scoped, tag = 'output window, operand 0, single buffered']
    #allocation3 [shape = 's32[1]{0}', space=sflag, size = 0x4, scoped, tag = 'scoped memory for tpu_custom_call.1']
    %8 = vsyncpa [#allocation3], 0
    // Predicated region
    $region2: #{tpu_custom_call.1} parent=1 // pred_check
      _
    $region3: #{tpu_custom_call.1} parent=1 // pred_check_branch
      %10 = sbr.rel (0) target = $region5
    $region4: #{tpu_custom_call.1} parent=1 // pred_region
      _
    $region5: #{tpu_custom_call.1} parent=1 // pred_fallthru
      _
    // Predicated region
    $region6: #{tpu_custom_call.1} parent=1 // pred_check
      _
    $region7: #{tpu_custom_call.1} parent=1 // pred_check_branch
      %12 = sbr.rel (0) target = $region9
    $region8: #{tpu_custom_call.1} parent=1 // pred_region
      _
    $region9: #{tpu_custom_call.1} parent=1 // pred_fallthru
      _
    // Predicated region
    $region10: #{tpu_custom_call.1} parent=1 // pred_check
      _
    $region11: #{tpu_custom_call.1} parent=1 // pred_check_branch
      %14 = sbr.rel (0) target = $region13
    $region12: #{tpu_custom_call.1} parent=1 // pred_region
      _
    $region13: #{tpu_custom_call.1} parent=1 // pred_fallthru
      _
    %v16 = vld [vmem:[%s0] sm:$0xf]
    %v17 = vld [vmem:[%s2] sm:$0xf]
    %v18 = vld [vmem:[%s2 + $0x4] sm:$0xf]
    %v19 = vld [vmem:[%s2 + $0x8] sm:$0xf]
    %v23 = vunpack.c.l.b16 %v17
    %v24 = vunpack.c.l.b16 %v18
    %v25 = vunpack.c.l.b16 %v19
    %v26 = vpack.c.b16 %v24, %v23
    %v27 = vpack.c.b16 %v25, %v25
    %v30 = vunpack.c.l.s4 1983009808
    %v31 = vunpack.c.0.s8 %v30
    %v32 = vlaneseq
    %v33 = vshrl.u32 %v32, 7
    %v34 = vsub.s32 %v31, %v33
    %v35 = vrot.slane %v16, %v34
    %v36 = vcombine.high %v35, %v35
    %vm37 = vcmask 31744
    %v39 = vsel %vm37, %v26, 0
    %v42 = vsel %vm37, %v27, 0
    %vm44 = vcmask 1041408
    %v46 = vsel %vm44, %v35, 0
    %v49 = vsel %vm44, %v36, 0
    %51 = vmatprep.subr.bf16.mxu0 %v49
    %52 = vmatpush1.bf16.msra.mxu0 %v46
    %53 = vmatprep.subr.bf16.mxu0 0
    %54 = vmatpush1.bf16.msra.mxu0 0
    %55 = vmatprep.subr.bf16.mxu0 0
    %56 = vmatpush1.bf16.msra.mxu0 0
    %57 = vmatprep.subr.bf16.mxu0 0
    %58 = vmatpush1.bf16.msra.mxu0 0
    %59 = vmatprep.subr.bf16.mxu0 0
    %60 = vmatpush1.bf16.msra.mxu0 0
    %61 = vmatprep.subr.bf16.mxu0 0
    %62 = vmatpush1.bf16.msra.mxu0 0
    %63 = vmatprep.subr.bf16.mxu0 0
    %64 = vmatpush1.bf16.msra.mxu0 0
    %65 = vmatprep.subr.bf16.mxu0 0
    %66 = vmatpush1.bf16.msra.mxu0 0
    %67 = vmatprep.subr.bf16.mxu0 0
    %68 = vmatpush1.bf16.msra.mxu0 0
    %69 = vmatprep.subr.bf16.mxu0 0
    %70 = vmatpush1.bf16.msra.mxu0 0
    %71 = vmatprep.subr.bf16.mxu0 0
    %72 = vmatpush1.bf16.msra.mxu0 0
    %73 = vmatprep.subr.bf16.mxu0 0
    %74 = vmatpush1.bf16.msra.mxu0 0
    %75 = vmatprep.subr.bf16.mxu0 0
    %76 = vmatpush1.bf16.msra.mxu0 0
    %77 = vmatprep.subr.bf16.mxu0 0
    %78 = vmatpush1.bf16.msra.mxu0 0
    %79 = vmatprep.subr.bf16.mxu0 0
    %80 = vmatpush1.bf16.msra.mxu0 0
    %81 = vmatprep.subr.bf16.mxu0 0
    %82 = vmatpush1.bf16.msra.mxu0 0
    %83 = vmatprep.mubr.bf16.mxu0 0
    %84 = vmatmul.mubr.bf16.gmra.mrb[0].mxu0 %v39
    %v85 = vpop.f32.mrb[0].mxu0
    %v86 = vadd.f32 0.0, %v85
    %v87 = vpop.f32.mrb[0].mxu0
    %v88 = vadd.f32 0.0, %v87
    %v89 = vpop.f32.mrb[0].mxu0
    %v90 = vadd.f32 0.0, %v89
    %v91 = vpop.f32.mrb[0].mxu0
    %v92 = vadd.f32 0.0, %v91
    %93 = vmatprep.mubr.bf16.mxu0 0
    %94 = vmatmul.mubr.bf16.gmra.mrb[0].mxu0 %v42
    %v95 = vpop.f32.mrb[0].mxu0
    %v96 = vadd.f32 0.0, %v95
    %v97 = vpop.f32.mrb[0].mxu0
    %v98 = vadd.f32 0.0, %v97
    %v99 = vpop.f32.mrb[0].mxu0
    %v100 = vpop.f32.mrb[0].mxu0
    %101 = vdwg.mxu0
    %v102 = vpack.c.bf16 %v90, %v86
    %v103 = vpack.c.bf16 %v92, %v88
    %v104 = vpack.c.bf16 %v96, %v96
    %v105 = vpack.c.bf16 %v98, %v98
    %108 = vrot.lane.b32.xlu0 %v102, 112
    %v109 = vpop.permute.xlu0 %108
    %110 = vrot.lane.b32.xlu0 %v104, 112
    %v111 = vpop.permute.xlu0 %110
    %114 = vrot.lane.b32.xlu0 %v102, 96
    %v115 = vpop.permute.xlu0 %114
    %116 = vrot.lane.b32.xlu0 %v104, 96
    %v117 = vpop.permute.xlu0 %116
    %120 = vrot.lane.b32.xlu0 %v102, 80
    %v121 = vpop.permute.xlu0 %120
    %122 = vrot.lane.b32.xlu0 %v104, 80
    %v123 = vpop.permute.xlu0 %122
    %126 = vrot.lane.b32.xlu0 %v102, 64
    %v127 = vpop.permute.xlu0 %126
    %128 = vrot.lane.b32.xlu0 %v104, 64
    %v129 = vpop.permute.xlu0 %128
    %132 = vrot.lane.b32.xlu0 %v102, 48
    %v133 = vpop.permute.xlu0 %132
    %134 = vrot.lane.b32.xlu0 %v104, 48
    %v135 = vpop.permute.xlu0 %134
    %138 = vrot.lane.b32.xlu0 %v102, 32
    %v139 = vpop.permute.xlu0 %138
    %140 = vrot.lane.b32.xlu0 %v104, 32
    %v141 = vpop.permute.xlu0 %140
    %144 = vrot.lane.b32.xlu0 %v102, 16
    %v145 = vpop.permute.xlu0 %144
    %146 = vrot.lane.b32.xlu0 %v104, 16
    %v147 = vpop.permute.xlu0 %146
    %152 = vrot.lane.b32.xlu0 %v103, 112
    %v153 = vpop.permute.xlu0 %152
    %154 = vrot.lane.b32.xlu0 %v105, 112
    %v155 = vpop.permute.xlu0 %154
    %158 = vrot.lane.b32.xlu0 %v103, 96
    %v159 = vpop.permute.xlu0 %158
    %160 = vrot.lane.b32.xlu0 %v105, 96
    %v161 = vpop.permute.xlu0 %160
    %164 = vrot.lane.b32.xlu0 %v103, 80
    %v165 = vpop.permute.xlu0 %164
    %166 = vrot.lane.b32.xlu0 %v105, 80
    %v167 = vpop.permute.xlu0 %166
    %170 = vrot.lane.b32.xlu0 %v103, 64
    %v171 = vpop.permute.xlu0 %170
    %172 = vrot.lane.b32.xlu0 %v105, 64
    %v173 = vpop.permute.xlu0 %172
    %176 = vrot.lane.b32.xlu0 %v103, 48
    %v177 = vpop.permute.xlu0 %176
    %178 = vrot.lane.b32.xlu0 %v105, 48
    %v179 = vpop.permute.xlu0 %178
    %182 = vrot.lane.b32.xlu0 %v103, 32
    %v183 = vpop.permute.xlu0 %182
    %184 = vrot.lane.b32.xlu0 %v105, 32
    %v185 = vpop.permute.xlu0 %184
    %188 = vrot.lane.b32.xlu0 %v103, 16
    %v189 = vpop.permute.xlu0 %188
    %190 = vrot.lane.b32.xlu0 %v105, 16
    %v191 = vpop.permute.xlu0 %190
    %v194 = vcombine.low %v102, %v127
    %v195 = vcombine.high %v102, %v127
    %v197 = vunpack.c.l.s4 1983009808
    %v198 = vunpack.c.0.s8 %v197
    %v199 = vlaneseq
    %v200 = vshrl.u32 %v199, 7
    %v201 = vsub.s32 %v198, %v200
    %v202 = vrot.slane %v194, %v201
    %v204 = vunpack.c.l.s4 1983009808
    %v205 = vunpack.c.0.s8 %v204
    %v206 = vlaneseq
    %v207 = vshrl.u32 %v206, 7
    %v208 = vsub.s32 %v205, %v207
    %v209 = vrot.slane %v195, %v208
    %v210 = vcombine.low %v115, %v139
    %v211 = vcombine.high %v115, %v139
    %v213 = vunpack.c.l.s4 1983009808
    %v214 = vunpack.c.0.s8 %v213
    %v215 = vlaneseq
    %v216 = vshrl.u32 %v215, 7
    %v217 = vsub.s32 %v214, %v216
    %v218 = vrot.slane %v210, %v217
    %v220 = vunpack.c.l.s4 1983009808
    %v221 = vunpack.c.0.s8 %v220
    %v222 = vlaneseq
    %v223 = vshrl.u32 %v222, 7
    %v224 = vsub.s32 %v221, %v223
    %v225 = vrot.slane %v211, %v224
    %v226 = vcombine.low %v103, %v171
    %v227 = vcombine.high %v103, %v171
    %v229 = vunpack.c.l.s4 1983009808
    %v230 = vunpack.c.0.s8 %v229
    %v231 = vlaneseq
    %v232 = vshrl.u32 %v231, 7
    %v233 = vsub.s32 %v230, %v232
    %v234 = vrot.slane %v226, %v233
    %v236 = vunpack.c.l.s4 1983009808
    %v237 = vunpack.c.0.s8 %v236
    %v238 = vlaneseq
    %v239 = vshrl.u32 %v238, 7
    %v240 = vsub.s32 %v237, %v239
    %v241 = vrot.slane %v227, %v240
    %v242 = vcombine.low %v159, %v183
    %v243 = vcombine.high %v159, %v183
    %v245 = vunpack.c.l.s4 1983009808
    %v246 = vunpack.c.0.s8 %v245
    %v247 = vlaneseq
    %v248 = vshrl.u32 %v247, 7
    %v249 = vsub.s32 %v246, %v248
    %v250 = vrot.slane %v242, %v249
    %v252 = vunpack.c.l.s4 1983009808
    %v253 = vunpack.c.0.s8 %v252
    %v254 = vlaneseq
    %v255 = vshrl.u32 %v254, 7
    %v256 = vsub.s32 %v253, %v255
    %v257 = vrot.slane %v243, %v256
    %v258 = vcombine.low %v202, %v218
    %v259 = vcombine.high %v202, %v218
    %v261 = vunpack.c.l.s4 1934713408
    %v262 = vunpack.c.0.s8 %v261
    %v263 = vlaneseq
    %v264 = vshrl.u32 %v263, 7
    %v265 = vsub.s32 %v262, %v264
    %v266 = vrot.slane %v258, %v265
    %v268 = vunpack.c.l.s4 1934713408
    %v269 = vunpack.c.0.s8 %v268
    %v270 = vlaneseq
    %v271 = vshrl.u32 %v270, 7
    %v272 = vsub.s32 %v269, %v271
    %v273 = vrot.slane %v259, %v272
    %v274 = vcombine.low %v209, %v225
    %v275 = vcombine.high %v209, %v225
    %v277 = vunpack.c.l.s4 1934713408
    %v278 = vunpack.c.0.s8 %v277
    %v279 = vlaneseq
    %v280 = vshrl.u32 %v279, 7
    %v281 = vsub.s32 %v278, %v280
    %v282 = vrot.slane %v274, %v281
    %v284 = vunpack.c.l.s4 1934713408
    %v285 = vunpack.c.0.s8 %v284
    %v286 = vlaneseq
    %v287 = vshrl.u32 %v286, 7
    %v288 = vsub.s32 %v285, %v287
    %v289 = vrot.slane %v275, %v288
    %v290 = vcombine.low %v234, %v250
    %v291 = vcombine.high %v234, %v250
    %v293 = vunpack.c.l.s4 1934713408
    %v294 = vunpack.c.0.s8 %v293
    %v295 = vlaneseq
    %v296 = vshrl.u32 %v295, 7
    %v297 = vsub.s32 %v294, %v296
    %v298 = vrot.slane %v290, %v297
    %v300 = vunpack.c.l.s4 1934713408
    %v301 = vunpack.c.0.s8 %v300
    %v302 = vlaneseq
    %v303 = vshrl.u32 %v302, 7
    %v304 = vsub.s32 %v301, %v303
    %v305 = vrot.slane %v291, %v304
    %v306 = vcombine.low %v241, %v257
    %v307 = vcombine.high %v241, %v257
    %v309 = vunpack.c.l.s4 1934713408
    %v310 = vunpack.c.0.s8 %v309
    %v311 = vlaneseq
    %v312 = vshrl.u32 %v311, 7
    %v313 = vsub.s32 %v310, %v312
    %v314 = vrot.slane %v306, %v313
    %v316 = vunpack.c.l.s4 1934713408
    %v317 = vunpack.c.0.s8 %v316
    %v318 = vlaneseq
    %v319 = vshrl.u32 %v318, 7
    %v320 = vsub.s32 %v317, %v319
    %v321 = vrot.slane %v307, %v320
    %v322 = vcombine.low %v266, %v298
    %v323 = vcombine.high %v266, %v298
    %v324 = vcombine.low %v273, %v305
    %v325 = vcombine.high %v273, %v305
    %v326 = vcombine.low %v282, %v314
    %v327 = vcombine.high %v282, %v314
    %v328 = vcombine.low %v289, %v321
    %v329 = vcombine.high %v289, %v321
    %v330 = vcombine.low %v109, %v133
    %v331 = vcombine.high %v109, %v133
    %v333 = vunpack.c.l.s4 1983009808
    %v334 = vunpack.c.0.s8 %v333
    %v335 = vlaneseq
    %v336 = vshrl.u32 %v335, 7
    %v337 = vsub.s32 %v334, %v336
    %v338 = vrot.slane %v330, %v337
    %v340 = vunpack.c.l.s4 1983009808
    %v341 = vunpack.c.0.s8 %v340
    %v342 = vlaneseq
    %v343 = vshrl.u32 %v342, 7
    %v344 = vsub.s32 %v341, %v343
    %v345 = vrot.slane %v331, %v344
    %v346 = vcombine.low %v121, %v145
    %v347 = vcombine.high %v121, %v145
    %v349 = vunpack.c.l.s4 1983009808
    %v350 = vunpack.c.0.s8 %v349
    %v351 = vlaneseq
    %v352 = vshrl.u32 %v351, 7
    %v353 = vsub.s32 %v350, %v352
    %v354 = vrot.slane %v346, %v353
    %v356 = vunpack.c.l.s4 1983009808
    %v357 = vunpack.c.0.s8 %v356
    %v358 = vlaneseq
    %v359 = vshrl.u32 %v358, 7
    %v360 = vsub.s32 %v357, %v359
    %v361 = vrot.slane %v347, %v360
    %v362 = vcombine.low %v153, %v177
    %v363 = vcombine.high %v153, %v177
    %v365 = vunpack.c.l.s4 1983009808
    %v366 = vunpack.c.0.s8 %v365
    %v367 = vlaneseq
    %v368 = vshrl.u32 %v367, 7
    %v369 = vsub.s32 %v366, %v368
    %v370 = vrot.slane %v362, %v369
    %v372 = vunpack.c.l.s4 1983009808
    %v373 = vunpack.c.0.s8 %v372
    %v374 = vlaneseq
    %v375 = vshrl.u32 %v374, 7
    %v376 = vsub.s32 %v373, %v375
    %v377 = vrot.slane %v363, %v376
    %v378 = vcombine.low %v165, %v189
    %v379 = vcombine.high %v165, %v189
    %v381 = vunpack.c.l.s4 1983009808
    %v382 = vunpack.c.0.s8 %v381
    %v383 = vlaneseq
    %v384 = vshrl.u32 %v383, 7
    %v385 = vsub.s32 %v382, %v384
    %v386 = vrot.slane %v378, %v385
    %v388 = vunpack.c.l.s4 1983009808
    %v389 = vunpack.c.0.s8 %v388
    %v390 = vlaneseq
    %v391 = vshrl.u32 %v390, 7
    %v392 = vsub.s32 %v389, %v391
    %v393 = vrot.slane %v379, %v392
    %v394 = vcombine.low %v338, %v354
    %v395 = vcombine.high %v338, %v354
    %v397 = vunpack.c.l.s4 1934713408
    %v398 = vunpack.c.0.s8 %v397
    %v399 = vlaneseq
    %v400 = vshrl.u32 %v399, 7
    %v401 = vsub.s32 %v398, %v400
    %v402 = vrot.slane %v394, %v401
    %v404 = vunpack.c.l.s4 1934713408
    %v405 = vunpack.c.0.s8 %v404
    %v406 = vlaneseq
    %v407 = vshrl.u32 %v406, 7
    %v408 = vsub.s32 %v405, %v407
    %v409 = vrot.slane %v395, %v408
    %v410 = vcombine.low %v345, %v361
    %v411 = vcombine.high %v345, %v361
    %v413 = vunpack.c.l.s4 1934713408
    %v414 = vunpack.c.0.s8 %v413
    %v415 = vlaneseq
    %v416 = vshrl.u32 %v415, 7
    %v417 = vsub.s32 %v414, %v416
    %v418 = vrot.slane %v410, %v417
    %v420 = vunpack.c.l.s4 1934713408
    %v421 = vunpack.c.0.s8 %v420
    %v422 = vlaneseq
    %v423 = vshrl.u32 %v422, 7
    %v424 = vsub.s32 %v421, %v423
    %v425 = vrot.slane %v411, %v424
    %v426 = vcombine.low %v370, %v386
    %v427 = vcombine.high %v370, %v386
    %v429 = vunpack.c.l.s4 1934713408
    %v430 = vunpack.c.0.s8 %v429
    %v431 = vlaneseq
    %v432 = vshrl.u32 %v431, 7
    %v433 = vsub.s32 %v430, %v432
    %v434 = vrot.slane %v426, %v433
    %v436 = vunpack.c.l.s4 1934713408
    %v437 = vunpack.c.0.s8 %v436
    %v438 = vlaneseq
    %v439 = vshrl.u32 %v438, 7
    %v440 = vsub.s32 %v437, %v439
    %v441 = vrot.slane %v427, %v440
    %v442 = vcombine.low %v377, %v393
    %v443 = vcombine.high %v377, %v393
    %v445 = vunpack.c.l.s4 1934713408
    %v446 = vunpack.c.0.s8 %v445
    %v447 = vlaneseq
    %v448 = vshrl.u32 %v447, 7
    %v449 = vsub.s32 %v446, %v448
    %v450 = vrot.slane %v442, %v449
    %v452 = vunpack.c.l.s4 1934713408
    %v453 = vunpack.c.0.s8 %v452
    %v454 = vlaneseq
    %v455 = vshrl.u32 %v454, 7
    %v456 = vsub.s32 %v453, %v455
    %v457 = vrot.slane %v443, %v456
    %v458 = vcombine.low %v402, %v434
    %v459 = vcombine.high %v402, %v434
    %v460 = vcombine.low %v409, %v441
    %v461 = vcombine.high %v409, %v441
    %v462 = vcombine.low %v418, %v450
    %v463 = vcombine.high %v418, %v450
    %v464 = vcombine.low %v425, %v457
    %v465 = vcombine.high %v425, %v457
    %v466 = vcombine.low %v104, %v129
    %v468 = vunpack.c.l.s4 1983009808
    %v469 = vunpack.c.0.s8 %v468
    %v470 = vlaneseq
    %v471 = vshrl.u32 %v470, 7
    %v472 = vsub.s32 %v469, %v471
    %v473 = vrot.slane %v466, %v472
    %v474 = vcombine.low %v117, %v141
    %v476 = vunpack.c.l.s4 1983009808
    %v477 = vunpack.c.0.s8 %v476
    %v478 = vlaneseq
    %v479 = vshrl.u32 %v478, 7
    %v480 = vsub.s32 %v477, %v479
    %v481 = vrot.slane %v474, %v480
    %v482 = vcombine.low %v105, %v173
    %v484 = vunpack.c.l.s4 1983009808
    %v485 = vunpack.c.0.s8 %v484
    %v486 = vlaneseq
    %v487 = vshrl.u32 %v486, 7
    %v488 = vsub.s32 %v485, %v487
    %v489 = vrot.slane %v482, %v488
    %v490 = vcombine.low %v161, %v185
    %v492 = vunpack.c.l.s4 1983009808
    %v493 = vunpack.c.0.s8 %v492
    %v494 = vlaneseq
    %v495 = vshrl.u32 %v494, 7
    %v496 = vsub.s32 %v493, %v495
    %v497 = vrot.slane %v490, %v496
    %v498 = vcombine.low %v473, %v481
    %v499 = vcombine.high %v473, %v481
    %v501 = vunpack.c.l.s4 1934713408
    %v502 = vunpack.c.0.s8 %v501
    %v503 = vlaneseq
    %v504 = vshrl.u32 %v503, 7
    %v505 = vsub.s32 %v502, %v504
    %v506 = vrot.slane %v498, %v505
    %v508 = vunpack.c.l.s4 1934713408
    %v509 = vunpack.c.0.s8 %v508
    %v510 = vlaneseq
    %v511 = vshrl.u32 %v510, 7
    %v512 = vsub.s32 %v509, %v511
    %v513 = vrot.slane %v499, %v512
    %v514 = vcombine.low %v489, %v497
    %v515 = vcombine.high %v489, %v497
    %v517 = vunpack.c.l.s4 1934713408
    %v518 = vunpack.c.0.s8 %v517
    %v519 = vlaneseq
    %v520 = vshrl.u32 %v519, 7
    %v521 = vsub.s32 %v518, %v520
    %v522 = vrot.slane %v514, %v521
    %v524 = vunpack.c.l.s4 1934713408
    %v525 = vunpack.c.0.s8 %v524
    %v526 = vlaneseq
    %v527 = vshrl.u32 %v526, 7
    %v528 = vsub.s32 %v525, %v527
    %v529 = vrot.slane %v515, %v528
    %v530 = vcombine.low %v506, %v522
    %v531 = vcombine.high %v506, %v522
    %v532 = vcombine.low %v513, %v529
    %v533 = vcombine.high %v513, %v529
    %v534 = vcombine.low %v111, %v135
    %v536 = vunpack.c.l.s4 1983009808
    %v537 = vunpack.c.0.s8 %v536
    %v538 = vlaneseq
    %v539 = vshrl.u32 %v538, 7
    %v540 = vsub.s32 %v537, %v539
    %v541 = vrot.slane %v534, %v540
    %v542 = vcombine.low %v123, %v147
    %v544 = vunpack.c.l.s4 1983009808
    %v545 = vunpack.c.0.s8 %v544
    %v546 = vlaneseq
    %v547 = vshrl.u32 %v546, 7
    %v548 = vsub.s32 %v545, %v547
    %v549 = vrot.slane %v542, %v548
    %v550 = vcombine.low %v155, %v179
    %v552 = vunpack.c.l.s4 1983009808
    %v553 = vunpack.c.0.s8 %v552
    %v554 = vlaneseq
    %v555 = vshrl.u32 %v554, 7
    %v556 = vsub.s32 %v553, %v555
    %v557 = vrot.slane %v550, %v556
    %v558 = vcombine.low %v167, %v191
    %v560 = vunpack.c.l.s4 1983009808
    %v561 = vunpack.c.0.s8 %v560
    %v562 = vlaneseq
    %v563 = vshrl.u32 %v562, 7
    %v564 = vsub.s32 %v561, %v563
    %v565 = vrot.slane %v558, %v564
    %v566 = vcombine.low %v541, %v549
    %v567 = vcombine.high %v541, %v549
    %v569 = vunpack.c.l.s4 1934713408
    %v570 = vunpack.c.0.s8 %v569
    %v571 = vlaneseq
    %v572 = vshrl.u32 %v571, 7
    %v573 = vsub.s32 %v570, %v572
    %v574 = vrot.slane %v566, %v573
    %v576 = vunpack.c.l.s4 1934713408
    %v577 = vunpack.c.0.s8 %v576
    %v578 = vlaneseq
    %v579 = vshrl.u32 %v578, 7
    %v580 = vsub.s32 %v577, %v579
    %v581 = vrot.slane %v567, %v580
    %v582 = vcombine.low %v557, %v565
    %v583 = vcombine.high %v557, %v565
    %v585 = vunpack.c.l.s4 1934713408
    %v586 = vunpack.c.0.s8 %v585
    %v587 = vlaneseq
    %v588 = vshrl.u32 %v587, 7
    %v589 = vsub.s32 %v586, %v588
    %v590 = vrot.slane %v582, %v589
    %v592 = vunpack.c.l.s4 1934713408
    %v593 = vunpack.c.0.s8 %v592
    %v594 = vlaneseq
    %v595 = vshrl.u32 %v594, 7
    %v596 = vsub.s32 %v593, %v595
    %v597 = vrot.slane %v583, %v596
    %v598 = vcombine.low %v574, %v590
    %v599 = vcombine.high %v574, %v590
    %v600 = vcombine.low %v581, %v597
    %v601 = vcombine.high %v581, %v597
    %v604 = vpack.i.b16 %v458, %v322
    %v605 = vshrl.u32 %v322, 16
    %v606 = vshrl.u32 %v458, 16
    %v607 = vpack.i.b16 %v606, %v605
    %v610 = vpack.i.b16 %v459, %v323
    %v611 = vshrl.u32 %v323, 16
    %v612 = vshrl.u32 %v459, 16
    %v613 = vpack.i.b16 %v612, %v611
    %v616 = vpack.i.b16 %v460, %v324
    %v617 = vshrl.u32 %v324, 16
    %v618 = vshrl.u32 %v460, 16
    %v619 = vpack.i.b16 %v618, %v617
    %v622 = vpack.i.b16 %v461, %v325
    %v623 = vshrl.u32 %v325, 16
    %v624 = vshrl.u32 %v461, 16
    %v625 = vpack.i.b16 %v624, %v623
    %v628 = vpack.i.b16 %v462, %v326
    %v629 = vshrl.u32 %v326, 16
    %v630 = vshrl.u32 %v462, 16
    %v631 = vpack.i.b16 %v630, %v629
    %v634 = vpack.i.b16 %v463, %v327
    %v635 = vshrl.u32 %v327, 16
    %v636 = vshrl.u32 %v463, 16
    %v637 = vpack.i.b16 %v636, %v635
    %v640 = vpack.i.b16 %v464, %v328
    %v641 = vshrl.u32 %v328, 16
    %v642 = vshrl.u32 %v464, 16
    %v643 = vpack.i.b16 %v642, %v641
    %v646 = vpack.i.b16 %v465, %v329
    %v647 = vshrl.u32 %v329, 16
    %v648 = vshrl.u32 %v465, 16
    %v649 = vpack.i.b16 %v648, %v647
    %v652 = vpack.i.b16 %v598, %v530
    %v653 = vshrl.u32 %v530, 16
    %v654 = vshrl.u32 %v598, 16
    %v655 = vpack.i.b16 %v654, %v653
    %v658 = vpack.i.b16 %v599, %v531
    %v659 = vshrl.u32 %v531, 16
    %v660 = vshrl.u32 %v599, 16
    %v661 = vpack.i.b16 %v660, %v659
    %v664 = vpack.i.b16 %v600, %v532
    %v665 = vshrl.u32 %v532, 16
    %v666 = vshrl.u32 %v600, 16
    %v667 = vpack.i.b16 %v666, %v665
    %v670 = vpack.i.b16 %v601, %v533
    %v671 = vshrl.u32 %v533, 16
    %v672 = vshrl.u32 %v601, 16
    %v673 = vpack.i.b16 %v672, %v671
    %v676 = vpack.i.b16 %v607, %v604
    %v678 = vshrl.u32 %v604, 16
    %v679 = vshrl.u32 %v607, 16
    %v680 = vpack.i.b16 %v679, %v678
    %v684 = vpack.i.b16 %v613, %v610
    %v686 = vshrl.u32 %v610, 16
    %v687 = vshrl.u32 %v613, 16
    %v688 = vpack.i.b16 %v687, %v686
    %v692 = vpack.i.b16 %v619, %v616
    %v694 = vshrl.u32 %v616, 16
    %v695 = vshrl.u32 %v619, 16
    %v696 = vpack.i.b16 %v695, %v694
    %v700 = vpack.i.b16 %v625, %v622
    %v702 = vshrl.u32 %v622, 16
    %v703 = vshrl.u32 %v625, 16
    %v704 = vpack.i.b16 %v703, %v702
    %v708 = vpack.i.b16 %v631, %v628
    %v710 = vshrl.u32 %v628, 16
    %v711 = vshrl.u32 %v631, 16
    %v712 = vpack.i.b16 %v711, %v710
    %v716 = vpack.i.b16 %v637, %v634
    %v718 = vshrl.u32 %v634, 16
    %v719 = vshrl.u32 %v637, 16
    %v720 = vpack.i.b16 %v719, %v718
    %v724 = vpack.i.b16 %v643, %v640
    %v726 = vshrl.u32 %v640, 16
    %v727 = vshrl.u32 %v643, 16
    %v728 = vpack.i.b16 %v727, %v726
    %v732 = vpack.i.b16 %v649, %v646
    %v734 = vshrl.u32 %v646, 16
    %v735 = vshrl.u32 %v649, 16
    %v736 = vpack.i.b16 %v735, %v734
    %v740 = vpack.i.b16 %v655, %v652
    %v742 = vshrl.u32 %v652, 16
    %v743 = vshrl.u32 %v655, 16
    %v744 = vpack.i.b16 %v743, %v742
    %v748 = vpack.i.b16 %v661, %v658
    %v750 = vshrl.u32 %v658, 16
    %v751 = vshrl.u32 %v661, 16
    %v752 = vpack.i.b16 %v751, %v750
    %v756 = vpack.i.b16 %v667, %v664
    %v758 = vshrl.u32 %v664, 16
    %v759 = vshrl.u32 %v667, 16
    %v760 = vpack.i.b16 %v759, %v758
    %v764 = vpack.i.b16 %v673, %v670
    %v766 = vshrl.u32 %v670, 16
    %v767 = vshrl.u32 %v673, 16
    %v768 = vpack.i.b16 %v767, %v766
    %v770 = vcombine.low %v676, %v692
    %v771 = vcombine.high %v676, %v692
    %v773 = vunpack.c.l.s4 1983009808
    %v774 = vunpack.c.0.s8 %v773
    %v775 = vlaneseq
    %v776 = vshrl.u32 %v775, 7
    %v777 = vsub.s32 %v774, %v776
    %v778 = vrot.slane %v770, %v777
    %v780 = vunpack.c.l.s4 1983009808
    %v781 = vunpack.c.0.s8 %v780
    %v782 = vlaneseq
    %v783 = vshrl.u32 %v782, 7
    %v784 = vsub.s32 %v781, %v783
    %v785 = vrot.slane %v771, %v784
    %v786 = vcombine.low %v684, %v700
    %v787 = vcombine.high %v684, %v700
    %v789 = vunpack.c.l.s4 1983009808
    %v790 = vunpack.c.0.s8 %v789
    %v791 = vlaneseq
    %v792 = vshrl.u32 %v791, 7
    %v793 = vsub.s32 %v790, %v792
    %v794 = vrot.slane %v786, %v793
    %v796 = vunpack.c.l.s4 1983009808
    %v797 = vunpack.c.0.s8 %v796
    %v798 = vlaneseq
    %v799 = vshrl.u32 %v798, 7
    %v800 = vsub.s32 %v797, %v799
    %v801 = vrot.slane %v787, %v800
    %v802 = vcombine.low %v778, %v794
    %v803 = vcombine.high %v778, %v794
    %v805 = vunpack.c.l.s4 1934713408
    %v806 = vunpack.c.0.s8 %v805
    %v807 = vlaneseq
    %v808 = vshrl.u32 %v807, 7
    %v809 = vsub.s32 %v806, %v808
    %v810 = vrot.slane %v802, %v809
    %v812 = vunpack.c.l.s4 1934713408
    %v813 = vunpack.c.0.s8 %v812
    %v814 = vlaneseq
    %v815 = vshrl.u32 %v814, 7
    %v816 = vsub.s32 %v813, %v815
    %v817 = vrot.slane %v803, %v816
    %v818 = vcombine.low %v785, %v801
    %v819 = vcombine.high %v785, %v801
    %v821 = vunpack.c.l.s4 1934713408
    %v822 = vunpack.c.0.s8 %v821
    %v823 = vlaneseq
    %v824 = vshrl.u32 %v823, 7
    %v825 = vsub.s32 %v822, %v824
    %v826 = vrot.slane %v818, %v825
    %v828 = vunpack.c.l.s4 1934713408
    %v829 = vunpack.c.0.s8 %v828
    %v830 = vlaneseq
    %v831 = vshrl.u32 %v830, 7
    %v832 = vsub.s32 %v829, %v831
    %v833 = vrot.slane %v819, %v832
    %v834 = vcombine.high %v810, 0
    %v835 = vcombine.high %v817, 0
    %v836 = vcombine.high %v826, 0
    %v837 = vcombine.high %v833, 0
    %v838 = vcombine.low %v680, %v696
    %v839 = vcombine.high %v680, %v696
    %v841 = vunpack.c.l.s4 1983009808
    %v842 = vunpack.c.0.s8 %v841
    %v843 = vlaneseq
    %v844 = vshrl.u32 %v843, 7
    %v845 = vsub.s32 %v842, %v844
    %v846 = vrot.slane %v838, %v845
    %v848 = vunpack.c.l.s4 1983009808
    %v849 = vunpack.c.0.s8 %v848
    %v850 = vlaneseq
    %v851 = vshrl.u32 %v850, 7
    %v852 = vsub.s32 %v849, %v851
    %v853 = vrot.slane %v839, %v852
    %v854 = vcombine.low %v688, %v704
    %v855 = vcombine.high %v688, %v704
    %v857 = vunpack.c.l.s4 1983009808
    %v858 = vunpack.c.0.s8 %v857
    %v859 = vlaneseq
    %v860 = vshrl.u32 %v859, 7
    %v861 = vsub.s32 %v858, %v860
    %v862 = vrot.slane %v854, %v861
    %v864 = vunpack.c.l.s4 1983009808
    %v865 = vunpack.c.0.s8 %v864
    %v866 = vlaneseq
    %v867 = vshrl.u32 %v866, 7
    %v868 = vsub.s32 %v865, %v867
    %v869 = vrot.slane %v855, %v868
    %v870 = vcombine.low %v846, %v862
    %v871 = vcombine.high %v846, %v862
    %v873 = vunpack.c.l.s4 1934713408
    %v874 = vunpack.c.0.s8 %v873
    %v875 = vlaneseq
    %v876 = vshrl.u32 %v875, 7
    %v877 = vsub.s32 %v874, %v876
    %v878 = vrot.slane %v870, %v877
    %v880 = vunpack.c.l.s4 1934713408
    %v881 = vunpack.c.0.s8 %v880
    %v882 = vlaneseq
    %v883 = vshrl.u32 %v882, 7
    %v884 = vsub.s32 %v881, %v883
    %v885 = vrot.slane %v871, %v884
    %v886 = vcombine.low %v853, %v869
    %v887 = vcombine.high %v853, %v869
    %v889 = vunpack.c.l.s4 1934713408
    %v890 = vunpack.c.0.s8 %v889
    %v891 = vlaneseq
    %v892 = vshrl.u32 %v891, 7
    %v893 = vsub.s32 %v890, %v892
    %v894 = vrot.slane %v886, %v893
    %v896 = vunpack.c.l.s4 1934713408
    %v897 = vunpack.c.0.s8 %v896
    %v898 = vlaneseq
    %v899 = vshrl.u32 %v898, 7
    %v900 = vsub.s32 %v897, %v899
    %v901 = vrot.slane %v887, %v900
    %v902 = vcombine.high %v878, 0
    %v903 = vcombine.high %v885, 0
    %v904 = vcombine.high %v894, 0
    %v905 = vcombine.high %v901, 0
    %v906 = vcombine.low %v708, %v724
    %v907 = vcombine.high %v708, %v724
    %v909 = vunpack.c.l.s4 1983009808
    %v910 = vunpack.c.0.s8 %v909
    %v911 = vlaneseq
    %v912 = vshrl.u32 %v911, 7
    %v913 = vsub.s32 %v910, %v912
    %v914 = vrot.slane %v906, %v913
    %v916 = vunpack.c.l.s4 1983009808
    %v917 = vunpack.c.0.s8 %v916
    %v918 = vlaneseq
    %v919 = vshrl.u32 %v918, 7
    %v920 = vsub.s32 %v917, %v919
    %v921 = vrot.slane %v907, %v920
    %v922 = vcombine.low %v716, %v732
    %v923 = vcombine.high %v716, %v732
    %v925 = vunpack.c.l.s4 1983009808
    %v926 = vunpack.c.0.s8 %v925
    %v927 = vlaneseq
    %v928 = vshrl.u32 %v927, 7
    %v929 = vsub.s32 %v926, %v928
    %v930 = vrot.slane %v922, %v929
    %v932 = vunpack.c.l.s4 1983009808
    %v933 = vunpack.c.0.s8 %v932
    %v934 = vlaneseq
    %v935 = vshrl.u32 %v934, 7
    %v936 = vsub.s32 %v933, %v935
    %v937 = vrot.slane %v923, %v936
    %v938 = vcombine.low %v914, %v930
    %v939 = vcombine.high %v914, %v930
    %v941 = vunpack.c.l.s4 1934713408
    %v942 = vunpack.c.0.s8 %v941
    %v943 = vlaneseq
    %v944 = vshrl.u32 %v943, 7
    %v945 = vsub.s32 %v942, %v944
    %v946 = vrot.slane %v938, %v945
    %v948 = vunpack.c.l.s4 1934713408
    %v949 = vunpack.c.0.s8 %v948
    %v950 = vlaneseq
    %v951 = vshrl.u32 %v950, 7
    %v952 = vsub.s32 %v949, %v951
    %v953 = vrot.slane %v939, %v952
    %v954 = vcombine.low %v921, %v937
    %v955 = vcombine.high %v921, %v937
    %v957 = vunpack.c.l.s4 1934713408
    %v958 = vunpack.c.0.s8 %v957
    %v959 = vlaneseq
    %v960 = vshrl.u32 %v959, 7
    %v961 = vsub.s32 %v958, %v960
    %v962 = vrot.slane %v954, %v961
    %v964 = vunpack.c.l.s4 1934713408
    %v965 = vunpack.c.0.s8 %v964
    %v966 = vlaneseq
    %v967 = vshrl.u32 %v966, 7
    %v968 = vsub.s32 %v965, %v967
    %v969 = vrot.slane %v955, %v968
    %v970 = vcombine.high %v946, 0
    %v971 = vcombine.high %v953, 0
    %v972 = vcombine.high %v962, 0
    %v973 = vcombine.high %v969, 0
    %v974 = vcombine.low %v712, %v728
    %v975 = vcombine.high %v712, %v728
    %v977 = vunpack.c.l.s4 1983009808
    %v978 = vunpack.c.0.s8 %v977
    %v979 = vlaneseq
    %v980 = vshrl.u32 %v979, 7
    %v981 = vsub.s32 %v978, %v980
    %v982 = vrot.slane %v974, %v981
    %v984 = vunpack.c.l.s4 1983009808
    %v985 = vunpack.c.0.s8 %v984
    %v986 = vlaneseq
    %v987 = vshrl.u32 %v986, 7
    %v988 = vsub.s32 %v985, %v987
    %v989 = vrot.slane %v975, %v988
    %v990 = vcombine.low %v720, %v736
    %v991 = vcombine.high %v720, %v736
    %v993 = vunpack.c.l.s4 1983009808
    %v994 = vunpack.c.0.s8 %v993
    %v995 = vlaneseq
    %v996 = vshrl.u32 %v995, 7
    %v997 = vsub.s32 %v994, %v996
    %v998 = vrot.slane %v990, %v997
    %v1000 = vunpack.c.l.s4 1983009808
    %v1001 = vunpack.c.0.s8 %v1000
    %v1002 = vlaneseq
    %v1003 = vshrl.u32 %v1002, 7
    %v1004 = vsub.s32 %v1001, %v1003
    %v1005 = vrot.slane %v991, %v1004
    %v1006 = vcombine.low %v982, %v998
    %v1007 = vcombine.high %v982, %v998
    %v1009 = vunpack.c.l.s4 1934713408
    %v1010 = vunpack.c.0.s8 %v1009
    %v1011 = vlaneseq
    %v1012 = vshrl.u32 %v1011, 7
    %v1013 = vsub.s32 %v1010, %v1012
    %v1014 = vrot.slane %v1006, %v1013
    %v1016 = vunpack.c.l.s4 1934713408
    %v1017 = vunpack.c.0.s8 %v1016
    %v1018 = vlaneseq
    %v1019 = vshrl.u32 %v1018, 7
    %v1020 = vsub.s32 %v1017, %v1019
    %v1021 = vrot.slane %v1007, %v1020
    %v1022 = vcombine.low %v989, %v1005
    %v1023 = vcombine.high %v989, %v1005
    %v1025 = vunpack.c.l.s4 1934713408
    %v1026 = vunpack.c.0.s8 %v1025
    %v1027 = vlaneseq
    %v1028 = vshrl.u32 %v1027, 7
    %v1029 = vsub.s32 %v1026, %v1028
    %v1030 = vrot.slane %v1022, %v1029
    %v1032 = vunpack.c.l.s4 1934713408
    %v1033 = vunpack.c.0.s8 %v1032
    %v1034 = vlaneseq
    %v1035 = vshrl.u32 %v1034, 7
    %v1036 = vsub.s32 %v1033, %v1035
    %v1037 = vrot.slane %v1023, %v1036
    %v1038 = vcombine.high %v1014, 0
    %v1039 = vcombine.high %v1021, 0
    %v1040 = vcombine.high %v1030, 0
    %v1041 = vcombine.high %v1037, 0
    %v1042 = vcombine.low %v740, %v756
    %v1043 = vcombine.high %v740, %v756
    %v1045 = vunpack.c.l.s4 1983009808
    %v1046 = vunpack.c.0.s8 %v1045
    %v1047 = vlaneseq
    %v1048 = vshrl.u32 %v1047, 7
    %v1049 = vsub.s32 %v1046, %v1048
    %v1050 = vrot.slane %v1042, %v1049
    %v1052 = vunpack.c.l.s4 1983009808
    %v1053 = vunpack.c.0.s8 %v1052
    %v1054 = vlaneseq
    %v1055 = vshrl.u32 %v1054, 7
    %v1056 = vsub.s32 %v1053, %v1055
    %v1057 = vrot.slane %v1043, %v1056
    %v1058 = vcombine.low %v748, %v764
    %v1059 = vcombine.high %v748, %v764
    %v1061 = vunpack.c.l.s4 1983009808
    %v1062 = vunpack.c.0.s8 %v1061
    %v1063 = vlaneseq
    %v1064 = vshrl.u32 %v1063, 7
    %v1065 = vsub.s32 %v1062, %v1064
    %v1066 = vrot.slane %v1058, %v1065
    %v1068 = vunpack.c.l.s4 1983009808
    %v1069 = vunpack.c.0.s8 %v1068
    %v1070 = vlaneseq
    %v1071 = vshrl.u32 %v1070, 7
    %v1072 = vsub.s32 %v1069, %v1071
    %v1073 = vrot.slane %v1059, %v1072
    %v1074 = vcombine.low %v1050, %v1066
    %v1075 = vcombine.high %v1050, %v1066
    %v1077 = vunpack.c.l.s4 1934713408
    %v1078 = vunpack.c.0.s8 %v1077
    %v1079 = vlaneseq
    %v1080 = vshrl.u32 %v1079, 7
    %v1081 = vsub.s32 %v1078, %v1080
    %v1082 = vrot.slane %v1074, %v1081
    %v1084 = vunpack.c.l.s4 1934713408
    %v1085 = vunpack.c.0.s8 %v1084
    %v1086 = vlaneseq
    %v1087 = vshrl.u32 %v1086, 7
    %v1088 = vsub.s32 %v1085, %v1087
    %v1089 = vrot.slane %v1075, %v1088
    %v1090 = vcombine.low %v1057, %v1073
    %v1091 = vcombine.high %v1057, %v1073
    %v1093 = vunpack.c.l.s4 1934713408
    %v1094 = vunpack.c.0.s8 %v1093
    %v1095 = vlaneseq
    %v1096 = vshrl.u32 %v1095, 7
    %v1097 = vsub.s32 %v1094, %v1096
    %v1098 = vrot.slane %v1090, %v1097
    %v1100 = vunpack.c.l.s4 1934713408
    %v1101 = vunpack.c.0.s8 %v1100
    %v1102 = vlaneseq
    %v1103 = vshrl.u32 %v1102, 7
    %v1104 = vsub.s32 %v1101, %v1103
    %v1105 = vrot.slane %v1091, %v1104
    %v1106 = vcombine.high %v1082, 0
    %v1107 = vcombine.high %v1089, 0
    %v1108 = vcombine.high %v1098, 0
    %v1109 = vcombine.high %v1105, 0
    %v1110 = vcombine.low %v744, %v760
    %v1111 = vcombine.high %v744, %v760
    %v1113 = vunpack.c.l.s4 1983009808
    %v1114 = vunpack.c.0.s8 %v1113
    %v1115 = vlaneseq
    %v1116 = vshrl.u32 %v1115, 7
    %v1117 = vsub.s32 %v1114, %v1116
    %v1118 = vrot.slane %v1110, %v1117
    %v1120 = vunpack.c.l.s4 1983009808
    %v1121 = vunpack.c.0.s8 %v1120
    %v1122 = vlaneseq
    %v1123 = vshrl.u32 %v1122, 7
    %v1124 = vsub.s32 %v1121, %v1123
    %v1125 = vrot.slane %v1111, %v1124
    %v1126 = vcombine.low %v752, %v768
    %v1127 = vcombine.high %v752, %v768
    %v1129 = vunpack.c.l.s4 1983009808
    %v1130 = vunpack.c.0.s8 %v1129
    %v1131 = vlaneseq
    %v1132 = vshrl.u32 %v1131, 7
    %v1133 = vsub.s32 %v1130, %v1132
    %v1134 = vrot.slane %v1126, %v1133
    %v1136 = vunpack.c.l.s4 1983009808
    %v1137 = vunpack.c.0.s8 %v1136
    %v1138 = vlaneseq
    %v1139 = vshrl.u32 %v1138, 7
    %v1140 = vsub.s32 %v1137, %v1139
    %v1141 = vrot.slane %v1127, %v1140
    %v1142 = vcombine.low %v1118, %v1134
    %v1143 = vcombine.high %v1118, %v1134
    %v1145 = vunpack.c.l.s4 1934713408
    %v1146 = vunpack.c.0.s8 %v1145
    %v1147 = vlaneseq
    %v1148 = vshrl.u32 %v1147, 7
    %v1149 = vsub.s32 %v1146, %v1148
    %v1150 = vrot.slane %v1142, %v1149
    %v1152 = vunpack.c.l.s4 1934713408
    %v1153 = vunpack.c.0.s8 %v1152
    %v1154 = vlaneseq
    %v1155 = vshrl.u32 %v1154, 7
    %v1156 = vsub.s32 %v1153, %v1155
    %v1157 = vrot.slane %v1143, %v1156
    %v1158 = vcombine.low %v1125, %v1141
    %v1159 = vcombine.high %v1125, %v1141
    %v1161 = vunpack.c.l.s4 1934713408
    %v1162 = vunpack.c.0.s8 %v1161
    %v1163 = vlaneseq
    %v1164 = vshrl.u32 %v1163, 7
    %v1165 = vsub.s32 %v1162, %v1164
    %v1166 = vrot.slane %v1158, %v1165
    %v1168 = vunpack.c.l.s4 1934713408
    %v1169 = vunpack.c.0.s8 %v1168
    %v1170 = vlaneseq
    %v1171 = vshrl.u32 %v1170, 7
    %v1172 = vsub.s32 %v1169, %v1171
    %v1173 = vrot.slane %v1159, %v1172
    %v1174 = vcombine.high %v1150, 0
    %v1175 = vcombine.high %v1157, 0
    %v1176 = vcombine.high %v1166, 0
    %v1177 = vcombine.high %v1173, 0
    %v1178 = vcombine.low %v810, %v817
    %v1180 = vunpack.c.l.s4 1983009808
    %v1181 = vunpack.c.0.s8 %v1180
    %v1182 = vlaneseq
    %v1183 = vshrl.u32 %v1182, 7
    %v1184 = vsub.s32 %v1181, %v1183
    %v1185 = vrot.slane %v1178, %v1184
    %v1186 = vcombine.low %v834, %v835
    %v1188 = vunpack.c.l.s4 1983009808
    %v1189 = vunpack.c.0.s8 %v1188
    %v1190 = vlaneseq
    %v1191 = vshrl.u32 %v1190, 7
    %v1192 = vsub.s32 %v1189, %v1191
    %v1193 = vrot.slane %v1186, %v1192
    %v1194 = vcombine.low %v826, %v833
    %v1196 = vunpack.c.l.s4 1983009808
    %v1197 = vunpack.c.0.s8 %v1196
    %v1198 = vlaneseq
    %v1199 = vshrl.u32 %v1198, 7
    %v1200 = vsub.s32 %v1197, %v1199
    %v1201 = vrot.slane %v1194, %v1200
    %v1202 = vcombine.low %v836, %v837
    %v1204 = vunpack.c.l.s4 1983009808
    %v1205 = vunpack.c.0.s8 %v1204
    %v1206 = vlaneseq
    %v1207 = vshrl.u32 %v1206, 7
    %v1208 = vsub.s32 %v1205, %v1207
    %v1209 = vrot.slane %v1202, %v1208
    %v1210 = vcombine.low %v1185, %v1193
    %v1211 = vcombine.high %v1185, %v1193
    %v1213 = vunpack.c.l.s4 1934713408
    %v1214 = vunpack.c.0.s8 %v1213
    %v1215 = vlaneseq
    %v1216 = vshrl.u32 %v1215, 7
    %v1217 = vsub.s32 %v1214, %v1216
    %v1218 = vrot.slane %v1210, %v1217
    %v1220 = vunpack.c.l.s4 1934713408
    %v1221 = vunpack.c.0.s8 %v1220
    %v1222 = vlaneseq
    %v1223 = vshrl.u32 %v1222, 7
    %v1224 = vsub.s32 %v1221, %v1223
    %v1225 = vrot.slane %v1211, %v1224
    %v1226 = vcombine.low %v1201, %v1209
    %v1227 = vcombine.high %v1201, %v1209
    %v1229 = vunpack.c.l.s4 1934713408
    %v1230 = vunpack.c.0.s8 %v1229
    %v1231 = vlaneseq
    %v1232 = vshrl.u32 %v1231, 7
    %v1233 = vsub.s32 %v1230, %v1232
    %v1234 = vrot.slane %v1226, %v1233
    %v1236 = vunpack.c.l.s4 1934713408
    %v1237 = vunpack.c.0.s8 %v1236
    %v1238 = vlaneseq
    %v1239 = vshrl.u32 %v1238, 7
    %v1240 = vsub.s32 %v1237, %v1239
    %v1241 = vrot.slane %v1227, %v1240
    %v1242 = vcombine.low %v1218, %v1234
    %v1243 = vcombine.high %v1218, %v1234
    %v1244 = vcombine.low %v1225, %v1241
    %v1245 = vcombine.high %v1225, %v1241
    %v1246 = vcombine.low %v878, %v885
    %v1248 = vunpack.c.l.s4 1983009808
    %v1249 = vunpack.c.0.s8 %v1248
    %v1250 = vlaneseq
    %v1251 = vshrl.u32 %v1250, 7
    %v1252 = vsub.s32 %v1249, %v1251
    %v1253 = vrot.slane %v1246, %v1252
    %v1254 = vcombine.low %v902, %v903
    %v1256 = vunpack.c.l.s4 1983009808
    %v1257 = vunpack.c.0.s8 %v1256
    %v1258 = vlaneseq
    %v1259 = vshrl.u32 %v1258, 7
    %v1260 = vsub.s32 %v1257, %v1259
    %v1261 = vrot.slane %v1254, %v1260
    %v1262 = vcombine.low %v894, %v901
    %v1264 = vunpack.c.l.s4 1983009808
    %v1265 = vunpack.c.0.s8 %v1264
    %v1266 = vlaneseq
    %v1267 = vshrl.u32 %v1266, 7
    %v1268 = vsub.s32 %v1265, %v1267
    %v1269 = vrot.slane %v1262, %v1268
    %v1270 = vcombine.low %v904, %v905
    %v1272 = vunpack.c.l.s4 1983009808
    %v1273 = vunpack.c.0.s8 %v1272
    %v1274 = vlaneseq
    %v1275 = vshrl.u32 %v1274, 7
    %v1276 = vsub.s32 %v1273, %v1275
    %v1277 = vrot.slane %v1270, %v1276
    %v1278 = vcombine.low %v1253, %v1261
    %v1279 = vcombine.high %v1253, %v1261
    %v1281 = vunpack.c.l.s4 1934713408
    %v1282 = vunpack.c.0.s8 %v1281
    %v1283 = vlaneseq
    %v1284 = vshrl.u32 %v1283, 7
    %v1285 = vsub.s32 %v1282, %v1284
    %v1286 = vrot.slane %v1278, %v1285
    %v1288 = vunpack.c.l.s4 1934713408
    %v1289 = vunpack.c.0.s8 %v1288
    %v1290 = vlaneseq
    %v1291 = vshrl.u32 %v1290, 7
    %v1292 = vsub.s32 %v1289, %v1291
    %v1293 = vrot.slane %v1279, %v1292
    %v1294 = vcombine.low %v1269, %v1277
    %v1295 = vcombine.high %v1269, %v1277
    %v1297 = vunpack.c.l.s4 1934713408
    %v1298 = vunpack.c.0.s8 %v1297
    %v1299 = vlaneseq
    %v1300 = vshrl.u32 %v1299, 7
    %v1301 = vsub.s32 %v1298, %v1300
    %v1302 = vrot.slane %v1294, %v1301
    %v1304 = vunpack.c.l.s4 1934713408
    %v1305 = vunpack.c.0.s8 %v1304
    %v1306 = vlaneseq
    %v1307 = vshrl.u32 %v1306, 7
    %v1308 = vsub.s32 %v1305, %v1307
    %v1309 = vrot.slane %v1295, %v1308
    %v1310 = vcombine.low %v1286, %v1302
    %v1311 = vcombine.high %v1286, %v1302
    %v1312 = vcombine.low %v1293, %v1309
    %v1313 = vcombine.high %v1293, %v1309
    %v1314 = vcombine.low %v946, %v953
    %v1316 = vunpack.c.l.s4 1983009808
    %v1317 = vunpack.c.0.s8 %v1316
    %v1318 = vlaneseq
    %v1319 = vshrl.u32 %v1318, 7
    %v1320 = vsub.s32 %v1317, %v1319
    %v1321 = vrot.slane %v1314, %v1320
    %v1322 = vcombine.low %v970, %v971
    %v1324 = vunpack.c.l.s4 1983009808
    %v1325 = vunpack.c.0.s8 %v1324
    %v1326 = vlaneseq
    %v1327 = vshrl.u32 %v1326, 7
    %v1328 = vsub.s32 %v1325, %v1327
    %v1329 = vrot.slane %v1322, %v1328
    %v1330 = vcombine.low %v962, %v969
    %v1332 = vunpack.c.l.s4 1983009808
    %v1333 = vunpack.c.0.s8 %v1332
    %v1334 = vlaneseq
    %v1335 = vshrl.u32 %v1334, 7
    %v1336 = vsub.s32 %v1333, %v1335
    %v1337 = vrot.slane %v1330, %v1336
    %v1338 = vcombine.low %v972, %v973
    %v1340 = vunpack.c.l.s4 1983009808
    %v1341 = vunpack.c.0.s8 %v1340
    %v1342 = vlaneseq
    %v1343 = vshrl.u32 %v1342, 7
    %v1344 = vsub.s32 %v1341, %v1343
    %v1345 = vrot.slane %v1338, %v1344
    %v1346 = vcombine.low %v1321, %v1329
    %v1347 = vcombine.high %v1321, %v1329
    %v1349 = vunpack.c.l.s4 1934713408
    %v1350 = vunpack.c.0.s8 %v1349
    %v1351 = vlaneseq
    %v1352 = vshrl.u32 %v1351, 7
    %v1353 = vsub.s32 %v1350, %v1352
    %v1354 = vrot.slane %v1346, %v1353
    %v1356 = vunpack.c.l.s4 1934713408
    %v1357 = vunpack.c.0.s8 %v1356
    %v1358 = vlaneseq
    %v1359 = vshrl.u32 %v1358, 7
    %v1360 = vsub.s32 %v1357, %v1359
    %v1361 = vrot.slane %v1347, %v1360
    %v1362 = vcombine.low %v1337, %v1345
    %v1363 = vcombine.high %v1337, %v1345
    %v1365 = vunpack.c.l.s4 1934713408
    %v1366 = vunpack.c.0.s8 %v1365
    %v1367 = vlaneseq
    %v1368 = vshrl.u32 %v1367, 7
    %v1369 = vsub.s32 %v1366, %v1368
    %v1370 = vrot.slane %v1362, %v1369
    %v1372 = vunpack.c.l.s4 1934713408
    %v1373 = vunpack.c.0.s8 %v1372
    %v1374 = vlaneseq
    %v1375 = vshrl.u32 %v1374, 7
    %v1376 = vsub.s32 %v1373, %v1375
    %v1377 = vrot.slane %v1363, %v1376
    %v1378 = vcombine.low %v1354, %v1370
    %v1379 = vcombine.high %v1354, %v1370
    %v1380 = vcombine.low %v1361, %v1377
    %v1381 = vcombine.high %v1361, %v1377
    %v1382 = vcombine.low %v1014, %v1021
    %v1384 = vunpack.c.l.s4 1983009808
    %v1385 = vunpack.c.0.s8 %v1384
    %v1386 = vlaneseq
    %v1387 = vshrl.u32 %v1386, 7
    %v1388 = vsub.s32 %v1385, %v1387
    %v1389 = vrot.slane %v1382, %v1388
    %v1390 = vcombine.low %v1038, %v1039
    %v1392 = vunpack.c.l.s4 1983009808
    %v1393 = vunpack.c.0.s8 %v1392
    %v1394 = vlaneseq
    %v1395 = vshrl.u32 %v1394, 7
    %v1396 = vsub.s32 %v1393, %v1395
    %v1397 = vrot.slane %v1390, %v1396
    %v1398 = vcombine.low %v1030, %v1037
    %v1400 = vunpack.c.l.s4 1983009808
    %v1401 = vunpack.c.0.s8 %v1400
    %v1402 = vlaneseq
    %v1403 = vshrl.u32 %v1402, 7
    %v1404 = vsub.s32 %v1401, %v1403
    %v1405 = vrot.slane %v1398, %v1404
    %v1406 = vcombine.low %v1040, %v1041
    %v1408 = vunpack.c.l.s4 1983009808
    %v1409 = vunpack.c.0.s8 %v1408
    %v1410 = vlaneseq
    %v1411 = vshrl.u32 %v1410, 7
    %v1412 = vsub.s32 %v1409, %v1411
    %v1413 = vrot.slane %v1406, %v1412
    %v1414 = vcombine.low %v1389, %v1397
    %v1415 = vcombine.high %v1389, %v1397
    %v1417 = vunpack.c.l.s4 1934713408
    %v1418 = vunpack.c.0.s8 %v1417
    %v1419 = vlaneseq
    %v1420 = vshrl.u32 %v1419, 7
    %v1421 = vsub.s32 %v1418, %v1420
    %v1422 = vrot.slane %v1414, %v1421
    %v1424 = vunpack.c.l.s4 1934713408
    %v1425 = vunpack.c.0.s8 %v1424
    %v1426 = vlaneseq
    %v1427 = vshrl.u32 %v1426, 7
    %v1428 = vsub.s32 %v1425, %v1427
    %v1429 = vrot.slane %v1415, %v1428
    %v1430 = vcombine.low %v1405, %v1413
    %v1431 = vcombine.high %v1405, %v1413
    %v1433 = vunpack.c.l.s4 1934713408
    %v1434 = vunpack.c.0.s8 %v1433
    %v1435 = vlaneseq
    %v1436 = vshrl.u32 %v1435, 7
    %v1437 = vsub.s32 %v1434, %v1436
    %v1438 = vrot.slane %v1430, %v1437
    %v1440 = vunpack.c.l.s4 1934713408
    %v1441 = vunpack.c.0.s8 %v1440
    %v1442 = vlaneseq
    %v1443 = vshrl.u32 %v1442, 7
    %v1444 = vsub.s32 %v1441, %v1443
    %v1445 = vrot.slane %v1431, %v1444
    %v1446 = vcombine.low %v1422, %v1438
    %v1447 = vcombine.high %v1422, %v1438
    %v1448 = vcombine.low %v1429, %v1445
    %v1449 = vcombine.high %v1429, %v1445
    %v1450 = vcombine.low %v1082, %v1089
    %v1452 = vunpack.c.l.s4 1983009808
    %v1453 = vunpack.c.0.s8 %v1452
    %v1454 = vlaneseq
    %v1455 = vshrl.u32 %v1454, 7
    %v1456 = vsub.s32 %v1453, %v1455
    %v1457 = vrot.slane %v1450, %v1456
    %v1458 = vcombine.low %v1106, %v1107
    %v1460 = vunpack.c.l.s4 1983009808
    %v1461 = vunpack.c.0.s8 %v1460
    %v1462 = vlaneseq
    %v1463 = vshrl.u32 %v1462, 7
    %v1464 = vsub.s32 %v1461, %v1463
    %v1465 = vrot.slane %v1458, %v1464
    %v1466 = vcombine.low %v1098, %v1105
    %v1468 = vunpack.c.l.s4 1983009808
    %v1469 = vunpack.c.0.s8 %v1468
    %v1470 = vlaneseq
    %v1471 = vshrl.u32 %v1470, 7
    %v1472 = vsub.s32 %v1469, %v1471
    %v1473 = vrot.slane %v1466, %v1472
    %v1474 = vcombine.low %v1108, %v1109
    %v1476 = vunpack.c.l.s4 1983009808
    %v1477 = vunpack.c.0.s8 %v1476
    %v1478 = vlaneseq
    %v1479 = vshrl.u32 %v1478, 7
    %v1480 = vsub.s32 %v1477, %v1479
    %v1481 = vrot.slane %v1474, %v1480
    %v1482 = vcombine.low %v1457, %v1465
    %v1483 = vcombine.high %v1457, %v1465
    %v1485 = vunpack.c.l.s4 1934713408
    %v1486 = vunpack.c.0.s8 %v1485
    %v1487 = vlaneseq
    %v1488 = vshrl.u32 %v1487, 7
    %v1489 = vsub.s32 %v1486, %v1488
    %v1490 = vrot.slane %v1482, %v1489
    %v1492 = vunpack.c.l.s4 1934713408
    %v1493 = vunpack.c.0.s8 %v1492
    %v1494 = vlaneseq
    %v1495 = vshrl.u32 %v1494, 7
    %v1496 = vsub.s32 %v1493, %v1495
    %v1497 = vrot.slane %v1483, %v1496
    %v1498 = vcombine.low %v1473, %v1481
    %v1499 = vcombine.high %v1473, %v1481
    %v1501 = vunpack.c.l.s4 1934713408
    %v1502 = vunpack.c.0.s8 %v1501
    %v1503 = vlaneseq
    %v1504 = vshrl.u32 %v1503, 7
    %v1505 = vsub.s32 %v1502, %v1504
    %v1506 = vrot.slane %v1498, %v1505
    %v1508 = vunpack.c.l.s4 1934713408
    %v1509 = vunpack.c.0.s8 %v1508
    %v1510 = vlaneseq
    %v1511 = vshrl.u32 %v1510, 7
    %v1512 = vsub.s32 %v1509, %v1511
    %v1513 = vrot.slane %v1499, %v1512
    %v1514 = vcombine.low %v1490, %v1506
    %v1515 = vcombine.high %v1490, %v1506
    %v1516 = vcombine.low %v1497, %v1513
    %v1517 = vcombine.high %v1497, %v1513
    %v1518 = vcombine.low %v1150, %v1157
    %v1520 = vunpack.c.l.s4 1983009808
    %v1521 = vunpack.c.0.s8 %v1520
    %v1522 = vlaneseq
    %v1523 = vshrl.u32 %v1522, 7
    %v1524 = vsub.s32 %v1521, %v1523
    %v1525 = vrot.slane %v1518, %v1524
    %v1526 = vcombine.low %v1174, %v1175
    %v1528 = vunpack.c.l.s4 1983009808
    %v1529 = vunpack.c.0.s8 %v1528
    %v1530 = vlaneseq
    %v1531 = vshrl.u32 %v1530, 7
    %v1532 = vsub.s32 %v1529, %v1531
    %v1533 = vrot.slane %v1526, %v1532
    %v1534 = vcombine.low %v1166, %v1173
    %v1536 = vunpack.c.l.s4 1983009808
    %v1537 = vunpack.c.0.s8 %v1536
    %v1538 = vlaneseq
    %v1539 = vshrl.u32 %v1538, 7
    %v1540 = vsub.s32 %v1537, %v1539
    %v1541 = vrot.slane %v1534, %v1540
    %v1542 = vcombine.low %v1176, %v1177
    %v1544 = vunpack.c.l.s4 1983009808
    %v1545 = vunpack.c.0.s8 %v1544
    %v1546 = vlaneseq
    %v1547 = vshrl.u32 %v1546, 7
    %v1548 = vsub.s32 %v1545, %v1547
    %v1549 = vrot.slane %v1542, %v1548
    %v1550 = vcombine.low %v1525, %v1533
    %v1551 = vcombine.high %v1525, %v1533
    %v1553 = vunpack.c.l.s4 1934713408
    %v1554 = vunpack.c.0.s8 %v1553
    %v1555 = vlaneseq
    %v1556 = vshrl.u32 %v1555, 7
    %v1557 = vsub.s32 %v1554, %v1556
    %v1558 = vrot.slane %v1550, %v1557
    %v1560 = vunpack.c.l.s4 1934713408
    %v1561 = vunpack.c.0.s8 %v1560
    %v1562 = vlaneseq
    %v1563 = vshrl.u32 %v1562, 7
    %v1564 = vsub.s32 %v1561, %v1563
    %v1565 = vrot.slane %v1551, %v1564
    %v1566 = vcombine.low %v1541, %v1549
    %v1567 = vcombine.high %v1541, %v1549
    %v1569 = vunpack.c.l.s4 1934713408
    %v1570 = vunpack.c.0.s8 %v1569
    %v1571 = vlaneseq
    %v1572 = vshrl.u32 %v1571, 7
    %v1573 = vsub.s32 %v1570, %v1572
    %v1574 = vrot.slane %v1566, %v1573
    %v1576 = vunpack.c.l.s4 1934713408
    %v1577 = vunpack.c.0.s8 %v1576
    %v1578 = vlaneseq
    %v1579 = vshrl.u32 %v1578, 7
    %v1580 = vsub.s32 %v1577, %v1579
    %v1581 = vrot.slane %v1567, %v1580
    %v1582 = vcombine.low %v1558, %v1574
    %v1583 = vcombine.high %v1558, %v1574
    %v1584 = vcombine.low %v1565, %v1581
    %v1585 = vcombine.high %v1565, %v1581
    %v1588 = vpack.i.b16 %v1310, %v1242
    %v1589 = vshrl.u32 %v1242, 16
    %v1590 = vshrl.u32 %v1310, 16
    %v1591 = vpack.i.b16 %v1590, %v1589
    %v1594 = vpack.i.b16 %v1311, %v1243
    %v1595 = vshrl.u32 %v1243, 16
    %v1596 = vshrl.u32 %v1311, 16
    %v1597 = vpack.i.b16 %v1596, %v1595
    %v1600 = vpack.i.b16 %v1312, %v1244
    %v1601 = vshrl.u32 %v1244, 16
    %v1602 = vshrl.u32 %v1312, 16
    %v1603 = vpack.i.b16 %v1602, %v1601
    %v1606 = vpack.i.b16 %v1313, %v1245
    %v1607 = vshrl.u32 %v1245, 16
    %v1608 = vshrl.u32 %v1313, 16
    %v1609 = vpack.i.b16 %v1608, %v1607
    %v1612 = vpack.i.b16 %v1446, %v1378
    %v1613 = vshrl.u32 %v1378, 16
    %v1614 = vshrl.u32 %v1446, 16
    %v1615 = vpack.i.b16 %v1614, %v1613
    %v1618 = vpack.i.b16 %v1447, %v1379
    %v1619 = vshrl.u32 %v1379, 16
    %v1620 = vshrl.u32 %v1447, 16
    %v1621 = vpack.i.b16 %v1620, %v1619
    %v1624 = vpack.i.b16 %v1448, %v1380
    %v1625 = vshrl.u32 %v1380, 16
    %v1626 = vshrl.u32 %v1448, 16
    %v1627 = vpack.i.b16 %v1626, %v1625
    %v1630 = vpack.i.b16 %v1449, %v1381
    %v1631 = vshrl.u32 %v1381, 16
    %v1632 = vshrl.u32 %v1449, 16
    %v1633 = vpack.i.b16 %v1632, %v1631
    %v1636 = vpack.i.b16 %v1582, %v1514
    %v1637 = vshrl.u32 %v1514, 16
    %v1638 = vshrl.u32 %v1582, 16
    %v1639 = vpack.i.b16 %v1638, %v1637
    %v1642 = vpack.i.b16 %v1583, %v1515
    %v1643 = vshrl.u32 %v1515, 16
    %v1644 = vshrl.u32 %v1583, 16
    %v1645 = vpack.i.b16 %v1644, %v1643
    %v1648 = vpack.i.b16 %v1584, %v1516
    %v1649 = vshrl.u32 %v1516, 16
    %v1650 = vshrl.u32 %v1584, 16
    %v1651 = vpack.i.b16 %v1650, %v1649
    %v1654 = vpack.i.b16 %v1585, %v1517
    %v1655 = vshrl.u32 %v1517, 16
    %v1656 = vshrl.u32 %v1585, 16
    %v1657 = vpack.i.b16 %v1656, %v1655
    %1658 = vrot.lane.b32.xlu0 %v1591, 16
    %v1659 = vpop.permute.xlu0 %1658
    %1660 = vrot.lane.b32.xlu0 %v1615, 16
    %v1661 = vpop.permute.xlu0 %1660
    %1662 = vrot.lane.b32.xlu0 %v1639, 16
    %v1663 = vpop.permute.xlu0 %1662
    %1664 = vrot.lane.b32.xlu0 %v1594, 32
    %v1665 = vpop.permute.xlu0 %1664
    %1666 = vrot.lane.b32.xlu0 %v1618, 32
    %v1667 = vpop.permute.xlu0 %1666
    %1668 = vrot.lane.b32.xlu0 %v1642, 32
    %v1669 = vpop.permute.xlu0 %1668
    %1670 = vrot.lane.b32.xlu0 %v1597, 48
    %v1671 = vpop.permute.xlu0 %1670
    %1672 = vrot.lane.b32.xlu0 %v1621, 48
    %v1673 = vpop.permute.xlu0 %1672
    %1674 = vrot.lane.b32.xlu0 %v1645, 48
    %v1675 = vpop.permute.xlu0 %1674
    %1676 = vrot.lane.b32.xlu0 %v1600, 64
    %v1677 = vpop.permute.xlu0 %1676
    %1678 = vrot.lane.b32.xlu0 %v1624, 64
    %v1679 = vpop.permute.xlu0 %1678
    %1680 = vrot.lane.b32.xlu0 %v1648, 64
    %v1681 = vpop.permute.xlu0 %1680
    %1682 = vrot.lane.b32.xlu0 %v1603, 80
    %v1683 = vpop.permute.xlu0 %1682
    %1684 = vrot.lane.b32.xlu0 %v1627, 80
    %v1685 = vpop.permute.xlu0 %1684
    %1686 = vrot.lane.b32.xlu0 %v1651, 80
    %v1687 = vpop.permute.xlu0 %1686
    %1688 = vrot.lane.b32.xlu0 %v1606, 96
    %v1689 = vpop.permute.xlu0 %1688
    %1690 = vrot.lane.b32.xlu0 %v1630, 96
    %v1691 = vpop.permute.xlu0 %1690
    %1692 = vrot.lane.b32.xlu0 %v1654, 96
    %v1693 = vpop.permute.xlu0 %1692
    %1694 = vrot.lane.b32.xlu0 %v1609, 112
    %v1695 = vpop.permute.xlu0 %1694
    %1696 = vrot.lane.b32.xlu0 %v1633, 112
    %v1697 = vpop.permute.xlu0 %1696
    %1698 = vrot.lane.b32.xlu0 %v1657, 112
    %v1699 = vpop.permute.xlu0 %1698
    %vm1700 = vcmask 130048
    %v1703 = vsel %vm1700, %v1588, %v1659
    %v1706 = vsel %vm1700, %v1612, %v1661
    %v1709 = vsel %vm1700, %v1636, %v1663
    %vm1710 = vcmask 261120
    %v1712 = vsel %vm1710, %v1703, %v1665
    %v1714 = vsel %vm1710, %v1706, %v1667
    %v1716 = vsel %vm1710, %v1709, %v1669
    %vm1717 = vcmask 392192
    %v1719 = vsel %vm1717, %v1712, %v1671
    %v1721 = vsel %vm1717, %v1714, %v1673
    %v1723 = vsel %vm1717, %v1716, %v1675
    %vm1724 = vcmask 523264
    %v1726 = vsel %vm1724, %v1719, %v1677
    %v1728 = vsel %vm1724, %v1721, %v1679
    %v1730 = vsel %vm1724, %v1723, %v1681
    %vm1731 = vcmask 654336
    %v1733 = vsel %vm1731, %v1726, %v1683
    %v1735 = vsel %vm1731, %v1728, %v1685
    %v1737 = vsel %vm1731, %v1730, %v1687
    %vm1738 = vcmask 785408
    %v1740 = vsel %vm1738, %v1733, %v1689
    %v1742 = vsel %vm1738, %v1735, %v1691
    %v1744 = vsel %vm1738, %v1737, %v1693
    %vm1745 = vcmask 916480
    %v1747 = vsel %vm1745, %v1740, %v1695
    %v1750 = vsel %vm1745, %v1742, %v1697
    %v1753 = vsel %vm1745, %v1744, %v1699
    %v1755 = vld [vmem:[%s1] sm:$0xf]
    %v1756 = vld [vmem:[%s1 + $0x4] sm:$0xf]
    %v1759 = vunpack.c.l.b16 %v1755
    %v1760 = vunpack.c.l.b16 %v1756
    %v1761 = vpack.c.b16 %v1760, %v1759
    %v1763 = vsel %vm1717, %v1761, 0
    %1765 = vmatprep.subr.bf16.mxu0 0
    %1766 = vmatpush1.bf16.msra.mxu0 %v1747
    %1767 = vmatprep.subr.bf16.mxu0 0
    %1768 = vmatpush1.bf16.msra.mxu0 %v1750
    %1769 = vmatprep.subr.bf16.mxu0 0
    %1770 = vmatpush1.bf16.msra.mxu0 %v1753
    %1771 = vmatprep.subr.bf16.mxu0 0
    %1772 = vmatpush1.bf16.msra.mxu0 0
    %1773 = vmatprep.subr.bf16.mxu0 0
    %1774 = vmatpush1.bf16.msra.mxu0 0
    %1775 = vmatprep.subr.bf16.mxu0 0
    %1776 = vmatpush1.bf16.msra.mxu0 0
    %1777 = vmatprep.subr.bf16.mxu0 0
    %1778 = vmatpush1.bf16.msra.mxu0 0
    %1779 = vmatprep.subr.bf16.mxu0 0
    %1780 = vmatpush1.bf16.msra.mxu0 0
    %1781 = vmatprep.subr.bf16.mxu0 0
    %1782 = vmatpush1.bf16.msra.mxu0 0
    %1783 = vmatprep.subr.bf16.mxu0 0
    %1784 = vmatpush1.bf16.msra.mxu0 0
    %1785 = vmatprep.subr.bf16.mxu0 0
    %1786 = vmatpush1.bf16.msra.mxu0 0
    %1787 = vmatprep.subr.bf16.mxu0 0
    %1788 = vmatpush1.bf16.msra.mxu0 0
    %1789 = vmatprep.subr.bf16.mxu0 0
    %1790 = vmatpush1.bf16.msra.mxu0 0
    %1791 = vmatprep.subr.bf16.mxu0 0
    %1792 = vmatpush1.bf16.msra.mxu0 0
    %1793 = vmatprep.subr.bf16.mxu0 0
    %1794 = vmatpush1.bf16.msra.mxu0 0
    %1795 = vmatprep.subr.bf16.mxu0 0
    %1796 = vmatpush1.bf16.msra.mxu0 0
    %1797 = vmatprep.mubr.bf16.mxu0 0
    %1798 = vmatmul.mubr.bf16.gmra.mrb[0].mxu0 %v1763
    %v1799 = vpop.f32.mrb[0].mxu0
    %v1800 = vadd.f32 0.0, %v1799
    %v1801 = vpop.f32.mrb[0].mxu0
    %v1802 = vpop.f32.mrb[0].mxu0
    %v1803 = vadd.f32 0.0, %v1802
    %v1804 = vpop.f32.mrb[0].mxu0
    %1805 = vdwg.mxu0
    %v1806 = vmax.f32 %v1800, 0.0
    %v1807 = vmax.f32 %v1803, 0.0
    %1808 = vst [vmem:[#allocation2] sm:$0xff] %v1806
    %1809 = vst [vmem:[#allocation2 + $0x8] sm:$0xff] %v1807
    // Predicated region
    $region14: #{tpu_custom_call.1} parent=1 // pred_check
      _
    $region15: #{tpu_custom_call.1} parent=1 // pred_check_branch
      %1811 = sbr.rel (0) target = $region17
    $region16: #{tpu_custom_call.1} parent=1 // pred_region
      %s1813 = ssub.s32 256, 256
      %1814 = vsyncadd [#allocation3], %s1813
      %s1815 = sshll.u32 [#allocation2], 4
      %s1816 = int_to_ptr.vmem [resolvable:$true] %s1815
      %1821 = dma.vmem_to_hbm [thread:$0]  %s1816, 256, %s3, [#allocation3], 128, 128, 8
    $region17: #{tpu_custom_call.1} parent=1 // pred_fallthru
      _
    // Predicated region
    $region18: #{tpu_custom_call.1} parent=1 // pred_check
      _
    $region19: #{tpu_custom_call.1} parent=1 // pred_check_branch
      %1823 = sbr.rel (0) target = $region21
    $region20: #{tpu_custom_call.1} parent=1 // pred_region
      %1824 = dma.done [#allocation3], 256
    $region21: #{tpu_custom_call.1} parent=1 // pred_fallthru
      _
    %1825 = vsyncpa [#allocation3], 1

// kernel: tpu_custom_call.1
$region0: #{tpu_custom_call.1}
  #allocation0 [shape = 'u32[]', space=smem, size = 0x4, offset = 0x4, fixed_abs, tag = 'smem constant byte address 0x4 - core index']
  #allocation1 [shape = 'u32[144,128]{1,0:T(1,128)}', space=vmem, size = 0x12000, scoped, tag = 'internal scratch']
  %s0 = inlined_call_operand.vmem [shape: bf16[1,4,256], index: 0, kind: input, shape index: {}]
  %s1 = inlined_call_operand.vmem [shape: bf16[16,48], index: 1, kind: input, shape index: {}]
  %s2 = inlined_call_operand.vmem [shape: bf16[24,4], index: 2, kind: input, shape index: {}]
  %s3 = inlined_call_operand.hbm [shape: f32[1,16,128], index: 3, kind: output, shape index: {}]
  %s4 = sld [smem:[#allocation0]]
  $region22: #{tpu_custom_call.1} parent=0
    _
  %s6 = ssub.s32 1, %s4
  %s7 = scalar_select 0, %s6, %s4
  $region1: #{tpu_custom_call.1} parent=0
    #allocation2 [shape = 'u8[8192]{0}', space=vmem, size = 0x2000, scoped, tag = 'output window, operand 0, single buffered']
    #allocation3 [shape = 's32[1]{0}', space=sflag, size = 0x4, scoped, tag = 'scoped memory for tpu_custom_call.1']
    %8 = vsyncpa [#allocation3], 0
    // Predicated region
    $region2: #{tpu_custom_call.1} parent=1 // pred_check
      _
    $region3: #{tpu_custom_call.1} parent=1 // pred_check_branch
      %10 = sbr.rel (0) target = $region5
    $region4: #{tpu_custom_call.1} parent=1 // pred_region
      _
    $region5: #{tpu_custom_call.1} parent=1 // pred_fallthru
      _
    // Predicated region
    $region6: #{tpu_custom_call.1} parent=1 // pred_check
      _
    $region7: #{tpu_custom_call.1} parent=1 // pred_check_branch
      %12 = sbr.rel (0) target = $region9
    $region8: #{tpu_custom_call.1} parent=1 // pred_region
      _
    $region9: #{tpu_custom_call.1} parent=1 // pred_fallthru
      _
    // Predicated region
    $region10: #{tpu_custom_call.1} parent=1 // pred_check
      _
    $region11: #{tpu_custom_call.1} parent=1 // pred_check_branch
      %14 = sbr.rel (0) target = $region13
    $region12: #{tpu_custom_call.1} parent=1 // pred_region
      _
    $region13: #{tpu_custom_call.1} parent=1 // pred_fallthru
      _
    %v16 = vld [vmem:[%s0] sm:$0xf]
    %v17 = vld [vmem:[%s2] sm:$0xf]
    %v18 = vld [vmem:[%s2 + $0x4] sm:$0xf]
    %v19 = vld [vmem:[%s2 + $0x8] sm:$0xf]
    %v23 = vunpack.c.l.b16 %v17
    %v24 = vunpack.c.l.b16 %v18
    %v25 = vunpack.c.l.b16 %v19
    %v26 = vpack.c.b16 %v24, %v23
    %v27 = vpack.c.b16 %v25, %v25
    %v30 = vunpack.c.l.s4 1983009808
    %v31 = vunpack.c.0.s8 %v30
    %v32 = vlaneseq
    %v33 = vshrl.u32 %v32, 7
    %v34 = vsub.s32 %v31, %v33
    %v35 = vrot.slane %v16, %v34
    %v36 = vcombine.high %v35, %v35
    %vm37 = vcmask 31744
    %v39 = vsel %vm37, %v26, 0
    %v42 = vsel %vm37, %v27, 0
    %vm44 = vcmask 1041408
    %v46 = vsel %vm44, %v35, 0
    %v49 = vsel %vm44, %v36, 0
    %51 = vmatprep.subr.bf16.mxu0 %v49
    %52 = vmatpush1.bf16.msra.mxu0 %v46
    %53 = vmatprep.subr.bf16.mxu0 0
    %54 = vmatpush1.bf16.msra.mxu0 0
    %55 = vmatprep.subr.bf16.mxu0 0
    %56 = vmatpush1.bf16.msra.mxu0 0
    %57 = vmatprep.subr.bf16.mxu0 0
    %58 = vmatpush1.bf16.msra.mxu0 0
    %59 = vmatprep.subr.bf16.mxu0 0
    %60 = vmatpush1.bf16.msra.mxu0 0
    %61 = vmatprep.subr.bf16.mxu0 0
    %62 = vmatpush1.bf16.msra.mxu0 0
    %63 = vmatprep.subr.bf16.mxu0 0
    %64 = vmatpush1.bf16.msra.mxu0 0
    %65 = vmatprep.subr.bf16.mxu0 0
    %66 = vmatpush1.bf16.msra.mxu0 0
    %67 = vmatprep.subr.bf16.mxu0 0
    %68 = vmatpush1.bf16.msra.mxu0 0
    %69 = vmatprep.subr.bf16.mxu0 0
    %70 = vmatpush1.bf16.msra.mxu0 0
    %71 = vmatprep.subr.bf16.mxu0 0
    %72 = vmatpush1.bf16.msra.mxu0 0
    %73 = vmatprep.subr.bf16.mxu0 0
    %74 = vmatpush1.bf16.msra.mxu0 0
    %75 = vmatprep.subr.bf16.mxu0 0
    %76 = vmatpush1.bf16.msra.mxu0 0
    %77 = vmatprep.subr.bf16.mxu0 0
    %78 = vmatpush1.bf16.msra.mxu0 0
    %79 = vmatprep.subr.bf16.mxu0 0
    %80 = vmatpush1.bf16.msra.mxu0 0
    %81 = vmatprep.subr.bf16.mxu0 0
    %82 = vmatpush1.bf16.msra.mxu0 0
    %83 = vmatprep.mubr.bf16.mxu0 0
    %84 = vmatmul.mubr.bf16.gmra.mrb[0].mxu0 %v39
    %v85 = vpop.f32.mrb[0].mxu0
    %v86 = vadd.f32 0.0, %v85
    %v87 = vpop.f32.mrb[0].mxu0
    %v88 = vadd.f32 0.0, %v87
    %v89 = vpop.f32.mrb[0].mxu0
    %v90 = vadd.f32 0.0, %v89
    %v91 = vpop.f32.mrb[0].mxu0
    %v92 = vadd.f32 0.0, %v91
    %93 = vmatprep.mubr.bf16.mxu0 0
    %94 = vmatmul.mubr.bf16.gmra.mrb[0].mxu0 %v42
    %v95 = vpop.f32.mrb[0].mxu0
    %v96 = vadd.f32 0.0, %v95
    %v97 = vpop.f32.mrb[0].mxu0
    %v98 = vadd.f32 0.0, %v97
    %v99 = vpop.f32.mrb[0].mxu0
    %v100 = vpop.f32.mrb[0].mxu0
    %101 = vdwg.mxu0
    %v102 = vpack.c.bf16 %v90, %v86
    %v103 = vpack.c.bf16 %v92, %v88
    %v104 = vpack.c.bf16 %v96, %v96
    %v105 = vpack.c.bf16 %v98, %v98
    %108 = vrot.lane.b32.xlu0 %v102, 112
    %v109 = vpop.permute.xlu0 %108
    %110 = vrot.lane.b32.xlu0 %v104, 112
    %v111 = vpop.permute.xlu0 %110
    %114 = vrot.lane.b32.xlu0 %v102, 96
    %v115 = vpop.permute.xlu0 %114
    %116 = vrot.lane.b32.xlu0 %v104, 96
    %v117 = vpop.permute.xlu0 %116
    %120 = vrot.lane.b32.xlu0 %v102, 80
    %v121 = vpop.permute.xlu0 %120
    %122 = vrot.lane.b32.xlu0 %v104, 80
    %v123 = vpop.permute.xlu0 %122
    %126 = vrot.lane.b32.xlu0 %v102, 64
    %v127 = vpop.permute.xlu0 %126
    %128 = vrot.lane.b32.xlu0 %v104, 64
    %v129 = vpop.permute.xlu0 %128
    %132 = vrot.lane.b32.xlu0 %v102, 48
    %v133 = vpop.permute.xlu0 %132
    %134 = vrot.lane.b32.xlu0 %v104, 48
    %v135 = vpop.permute.xlu0 %134
    %138 = vrot.lane.b32.xlu0 %v102, 32
    %v139 = vpop.permute.xlu0 %138
    %140 = vrot.lane.b32.xlu0 %v104, 32
    %v141 = vpop.permute.xlu0 %140
    %144 = vrot.lane.b32.xlu0 %v102, 16
    %v145 = vpop.permute.xlu0 %144
    %146 = vrot.lane.b32.xlu0 %v104, 16
    %v147 = vpop.permute.xlu0 %146
    %152 = vrot.lane.b32.xlu0 %v103, 112
    %v153 = vpop.permute.xlu0 %152
    %154 = vrot.lane.b32.xlu0 %v105, 112
    %v155 = vpop.permute.xlu0 %154
    %158 = vrot.lane.b32.xlu0 %v103, 96
    %v159 = vpop.permute.xlu0 %158
    %160 = vrot.lane.b32.xlu0 %v105, 96
    %v161 = vpop.permute.xlu0 %160
    %164 = vrot.lane.b32.xlu0 %v103, 80
    %v165 = vpop.permute.xlu0 %164
    %166 = vrot.lane.b32.xlu0 %v105, 80
    %v167 = vpop.permute.xlu0 %166
    %170 = vrot.lane.b32.xlu0 %v103, 64
    %v171 = vpop.permute.xlu0 %170
    %172 = vrot.lane.b32.xlu0 %v105, 64
    %v173 = vpop.permute.xlu0 %172
    %176 = vrot.lane.b32.xlu0 %v103, 48
    %v177 = vpop.permute.xlu0 %176
    %178 = vrot.lane.b32.xlu0 %v105, 48
    %v179 = vpop.permute.xlu0 %178
    %182 = vrot.lane.b32.xlu0 %v103, 32
    %v183 = vpop.permute.xlu0 %182
    %184 = vrot.lane.b32.xlu0 %v105, 32
    %v185 = vpop.permute.xlu0 %184
    %188 = vrot.lane.b32.xlu0 %v103, 16
    %v189 = vpop.permute.xlu0 %188
    %190 = vrot.lane.b32.xlu0 %v105, 16
    %v191 = vpop.permute.xlu0 %190
    %v194 = vcombine.low %v102, %v127
    %v195 = vcombine.high %v102, %v127
    %v197 = vunpack.c.l.s4 1983009808
    %v198 = vunpack.c.0.s8 %v197
    %v199 = vlaneseq
    %v200 = vshrl.u32 %v199, 7
    %v201 = vsub.s32 %v198, %v200
    %v202 = vrot.slane %v194, %v201
    %v204 = vunpack.c.l.s4 1983009808
    %v205 = vunpack.c.0.s8 %v204
    %v206 = vlaneseq
    %v207 = vshrl.u32 %v206, 7
    %v208 = vsub.s32 %v205, %v207
    %v209 = vrot.slane %v195, %v208
    %v210 = vcombine.low %v115, %v139
    %v211 = vcombine.high %v115, %v139
    %v213 = vunpack.c.l.s4 1983009808
    %v214 = vunpack.c.0.s8 %v213
    %v215 = vlaneseq
    %v216 = vshrl.u32 %v215, 7
    %v217 = vsub.s32 %v214, %v216
    %v218 = vrot.slane %v210, %v217
    %v220 = vunpack.c.l.s4 1983009808
    %v221 = vunpack.c.0.s8 %v220
    %v222 = vlaneseq
    %v223 = vshrl.u32 %v222, 7
    %v224 = vsub.s32 %v221, %v223
    %v225 = vrot.slane %v211, %v224
    %v226 = vcombine.low %v103, %v171
    %v227 = vcombine.high %v103, %v171
    %v229 = vunpack.c.l.s4 1983009808
    %v230 = vunpack.c.0.s8 %v229
    %v231 = vlaneseq
    %v232 = vshrl.u32 %v231, 7
    %v233 = vsub.s32 %v230, %v232
    %v234 = vrot.slane %v226, %v233
    %v236 = vunpack.c.l.s4 1983009808
    %v237 = vunpack.c.0.s8 %v236
    %v238 = vlaneseq
    %v239 = vshrl.u32 %v238, 7
    %v240 = vsub.s32 %v237, %v239
    %v241 = vrot.slane %v227, %v240
    %v242 = vcombine.low %v159, %v183
    %v243 = vcombine.high %v159, %v183
    %v245 = vunpack.c.l.s4 1983009808
    %v246 = vunpack.c.0.s8 %v245
    %v247 = vlaneseq
    %v248 = vshrl.u32 %v247, 7
    %v249 = vsub.s32 %v246, %v248
    %v250 = vrot.slane %v242, %v249
    %v252 = vunpack.c.l.s4 1983009808
    %v253 = vunpack.c.0.s8 %v252
    %v254 = vlaneseq
    %v255 = vshrl.u32 %v254, 7
    %v256 = vsub.s32 %v253, %v255
    %v257 = vrot.slane %v243, %v256
    %v258 = vcombine.low %v202, %v218
    %v259 = vcombine.high %v202, %v218
    %v261 = vunpack.c.l.s4 1934713408
    %v262 = vunpack.c.0.s8 %v261
    %v263 = vlaneseq
    %v264 = vshrl.u32 %v263, 7
    %v265 = vsub.s32 %v262, %v264
    %v266 = vrot.slane %v258, %v265
    %v268 = vunpack.c.l.s4 1934713408
    %v269 = vunpack.c.0.s8 %v268
    %v270 = vlaneseq
    %v271 = vshrl.u32 %v270, 7
    %v272 = vsub.s32 %v269, %v271
    %v273 = vrot.slane %v259, %v272
    %v274 = vcombine.low %v209, %v225
    %v275 = vcombine.high %v209, %v225
    %v277 = vunpack.c.l.s4 1934713408
    %v278 = vunpack.c.0.s8 %v277
    %v279 = vlaneseq
    %v280 = vshrl.u32 %v279, 7
    %v281 = vsub.s32 %v278, %v280
    %v282 = vrot.slane %v274, %v281
    %v284 = vunpack.c.l.s4 1934713408
    %v285 = vunpack.c.0.s8 %v284
    %v286 = vlaneseq
    %v287 = vshrl.u32 %v286, 7
    %v288 = vsub.s32 %v285, %v287
    %v289 = vrot.slane %v275, %v288
    %v290 = vcombine.low %v234, %v250
    %v291 = vcombine.high %v234, %v250
    %v293 = vunpack.c.l.s4 1934713408
    %v294 = vunpack.c.0.s8 %v293
    %v295 = vlaneseq
    %v296 = vshrl.u32 %v295, 7
    %v297 = vsub.s32 %v294, %v296
    %v298 = vrot.slane %v290, %v297
    %v300 = vunpack.c.l.s4 1934713408
    %v301 = vunpack.c.0.s8 %v300
    %v302 = vlaneseq
    %v303 = vshrl.u32 %v302, 7
    %v304 = vsub.s32 %v301, %v303
    %v305 = vrot.slane %v291, %v304
    %v306 = vcombine.low %v241, %v257
    %v307 = vcombine.high %v241, %v257
    %v309 = vunpack.c.l.s4 1934713408
    %v310 = vunpack.c.0.s8 %v309
    %v311 = vlaneseq
    %v312 = vshrl.u32 %v311, 7
    %v313 = vsub.s32 %v310, %v312
    %v314 = vrot.slane %v306, %v313
    %v316 = vunpack.c.l.s4 1934713408
    %v317 = vunpack.c.0.s8 %v316
    %v318 = vlaneseq
    %v319 = vshrl.u32 %v318, 7
    %v320 = vsub.s32 %v317, %v319
    %v321 = vrot.slane %v307, %v320
    %v322 = vcombine.low %v266, %v298
    %v323 = vcombine.high %v266, %v298
    %v324 = vcombine.low %v273, %v305
    %v325 = vcombine.high %v273, %v305
    %v326 = vcombine.low %v282, %v314
    %v327 = vcombine.high %v282, %v314
    %v328 = vcombine.low %v289, %v321
    %v329 = vcombine.high %v289, %v321
    %v330 = vcombine.low %v109, %v133
    %v331 = vcombine.high %v109, %v133
    %v333 = vunpack.c.l.s4 1983009808
    %v334 = vunpack.c.0.s8 %v333
    %v335 = vlaneseq
    %v336 = vshrl.u32 %v335, 7
    %v337 = vsub.s32 %v334, %v336
    %v338 = vrot.slane %v330, %v337
    %v340 = vunpack.c.l.s4 1983009808
    %v341 = vunpack.c.0.s8 %v340
    %v342 = vlaneseq
    %v343 = vshrl.u32 %v342, 7
    %v344 = vsub.s32 %v341, %v343
    %v345 = vrot.slane %v331, %v344
    %v346 = vcombine.low %v121, %v145
    %v347 = vcombine.high %v121, %v145
    %v349 = vunpack.c.l.s4 1983009808
    %v350 = vunpack.c.0.s8 %v349
    %v351 = vlaneseq
    %v352 = vshrl.u32 %v351, 7
    %v353 = vsub.s32 %v350, %v352
    %v354 = vrot.slane %v346, %v353
    %v356 = vunpack.c.l.s4 1983009808
    %v357 = vunpack.c.0.s8 %v356
    %v358 = vlaneseq
    %v359 = vshrl.u32 %v358, 7
    %v360 = vsub.s32 %v357, %v359
    %v361 = vrot.slane %v347, %v360
    %v362 = vcombine.low %v153, %v177
    %v363 = vcombine.high %v153, %v177
    %v365 = vunpack.c.l.s4 1983009808
    %v366 = vunpack.c.0.s8 %v365
    %v367 = vlaneseq
    %v368 = vshrl.u32 %v367, 7
    %v369 = vsub.s32 %v366, %v368
    %v370 = vrot.slane %v362, %v369
    %v372 = vunpack.c.l.s4 1983009808
    %v373 = vunpack.c.0.s8 %v372
    %v374 = vlaneseq
    %v375 = vshrl.u32 %v374, 7
    %v376 = vsub.s32 %v373, %v375
    %v377 = vrot.slane %v363, %v376
    %v378 = vcombine.low %v165, %v189
    %v379 = vcombine.high %v165, %v189
    %v381 = vunpack.c.l.s4 1983009808
    %v382 = vunpack.c.0.s8 %v381
    %v383 = vlaneseq
    %v384 = vshrl.u32 %v383, 7
    %v385 = vsub.s32 %v382, %v384
    %v386 = vrot.slane %v378, %v385
    %v388 = vunpack.c.l.s4 1983009808
    %v389 = vunpack.c.0.s8 %v388
    %v390 = vlaneseq
    %v391 = vshrl.u32 %v390, 7
    %v392 = vsub.s32 %v389, %v391
    %v393 = vrot.slane %v379, %v392
    %v394 = vcombine.low %v338, %v354
    %v395 = vcombine.high %v338, %v354
    %v397 = vunpack.c.l.s4 1934713408
    %v398 = vunpack.c.0.s8 %v397
    %v399 = vlaneseq
    %v400 = vshrl.u32 %v399, 7
    %v401 = vsub.s32 %v398, %v400
    %v402 = vrot.slane %v394, %v401
    %v404 = vunpack.c.l.s4 1934713408
    %v405 = vunpack.c.0.s8 %v404
    %v406 = vlaneseq
    %v407 = vshrl.u32 %v406, 7
    %v408 = vsub.s32 %v405, %v407
    %v409 = vrot.slane %v395, %v408
    %v410 = vcombine.low %v345, %v361
    %v411 = vcombine.high %v345, %v361
    %v413 = vunpack.c.l.s4 1934713408
    %v414 = vunpack.c.0.s8 %v413
    %v415 = vlaneseq
    %v416 = vshrl.u32 %v415, 7
    %v417 = vsub.s32 %v414, %v416
    %v418 = vrot.slane %v410, %v417
    %v420 = vunpack.c.l.s4 1934713408
    %v421 = vunpack.c.0.s8 %v420
    %v422 = vlaneseq
    %v423 = vshrl.u32 %v422, 7
    %v424 = vsub.s32 %v421, %v423
    %v425 = vrot.slane %v411, %v424
    %v426 = vcombine.low %v370, %v386
    %v427 = vcombine.high %v370, %v386
    %v429 = vunpack.c.l.s4 1934713408
    %v430 = vunpack.c.0.s8 %v429
    %v431 = vlaneseq
    %v432 = vshrl.u32 %v431, 7
    %v433 = vsub.s32 %v430, %v432
    %v434 = vrot.slane %v426, %v433
    %v436 = vunpack.c.l.s4 1934713408
    %v437 = vunpack.c.0.s8 %v436
    %v438 = vlaneseq
    %v439 = vshrl.u32 %v438, 7
    %v440 = vsub.s32 %v437, %v439
    %v441 = vrot.slane %v427, %v440
    %v442 = vcombine.low %v377, %v393
    %v443 = vcombine.high %v377, %v393
    %v445 = vunpack.c.l.s4 1934713408
    %v446 = vunpack.c.0.s8 %v445
    %v447 = vlaneseq
    %v448 = vshrl.u32 %v447, 7
    %v449 = vsub.s32 %v446, %v448
    %v450 = vrot.slane %v442, %v449
    %v452 = vunpack.c.l.s4 1934713408
    %v453 = vunpack.c.0.s8 %v452
    %v454 = vlaneseq
    %v455 = vshrl.u32 %v454, 7
    %v456 = vsub.s32 %v453, %v455
    %v457 = vrot.slane %v443, %v456
    %v458 = vcombine.low %v402, %v434
    %v459 = vcombine.high %v402, %v434
    %v460 = vcombine.low %v409, %v441
    %v461 = vcombine.high %v409, %v441
    %v462 = vcombine.low %v418, %v450
    %v463 = vcombine.high %v418, %v450
    %v464 = vcombine.low %v425, %v457
    %v465 = vcombine.high %v425, %v457
    %v466 = vcombine.low %v104, %v129
    %v468 = vunpack.c.l.s4 1983009808
    %v469 = vunpack.c.0.s8 %v468
    %v470 = vlaneseq
    %v471 = vshrl.u32 %v470, 7
    %v472 = vsub.s32 %v469, %v471
    %v473 = vrot.slane %v466, %v472
    %v474 = vcombine.low %v117, %v141
    %v476 = vunpack.c.l.s4 1983009808
    %v477 = vunpack.c.0.s8 %v476
    %v478 = vlaneseq
    %v479 = vshrl.u32 %v478, 7
    %v480 = vsub.s32 %v477, %v479
    %v481 = vrot.slane %v474, %v480
    %v482 = vcombine.low %v105, %v173
    %v484 = vunpack.c.l.s4 1983009808
    %v485 = vunpack.c.0.s8 %v484
    %v486 = vlaneseq
    %v487 = vshrl.u32 %v486, 7
    %v488 = vsub.s32 %v485, %v487
    %v489 = vrot.slane %v482, %v488
    %v490 = vcombine.low %v161, %v185
    %v492 = vunpack.c.l.s4 1983009808
    %v493 = vunpack.c.0.s8 %v492
    %v494 = vlaneseq
    %v495 = vshrl.u32 %v494, 7
    %v496 = vsub.s32 %v493, %v495
    %v497 = vrot.slane %v490, %v496
    %v498 = vcombine.low %v473, %v481
    %v499 = vcombine.high %v473, %v481
    %v501 = vunpack.c.l.s4 1934713408
    %v502 = vunpack.c.0.s8 %v501
    %v503 = vlaneseq
    %v504 = vshrl.u32 %v503, 7
    %v505 = vsub.s32 %v502, %v504
    %v506 = vrot.slane %v498, %v505
    %v508 = vunpack.c.l.s4 1934713408
    %v509 = vunpack.c.0.s8 %v508
    %v510 = vlaneseq
    %v511 = vshrl.u32 %v510, 7
    %v512 = vsub.s32 %v509, %v511
    %v513 = vrot.slane %v499, %v512
    %v514 = vcombine.low %v489, %v497
    %v515 = vcombine.high %v489, %v497
    %v517 = vunpack.c.l.s4 1934713408
    %v518 = vunpack.c.0.s8 %v517
    %v519 = vlaneseq
    %v520 = vshrl.u32 %v519, 7
    %v521 = vsub.s32 %v518, %v520
    %v522 = vrot.slane %v514, %v521
    %v524 = vunpack.c.l.s4 1934713408
    %v525 = vunpack.c.0.s8 %v524
    %v526 = vlaneseq
    %v527 = vshrl.u32 %v526, 7
    %v528 = vsub.s32 %v525, %v527
    %v529 = vrot.slane %v515, %v528
    %v530 = vcombine.low %v506, %v522
    %v531 = vcombine.high %v506, %v522
    %v532 = vcombine.low %v513, %v529
    %v533 = vcombine.high %v513, %v529
    %v534 = vcombine.low %v111, %v135
    %v536 = vunpack.c.l.s4 1983009808
    %v537 = vunpack.c.0.s8 %v536
    %v538 = vlaneseq
    %v539 = vshrl.u32 %v538, 7
    %v540 = vsub.s32 %v537, %v539
    %v541 = vrot.slane %v534, %v540
    %v542 = vcombine.low %v123, %v147
    %v544 = vunpack.c.l.s4 1983009808
    %v545 = vunpack.c.0.s8 %v544
    %v546 = vlaneseq
    %v547 = vshrl.u32 %v546, 7
    %v548 = vsub.s32 %v545, %v547
    %v549 = vrot.slane %v542, %v548
    %v550 = vcombine.low %v155, %v179
    %v552 = vunpack.c.l.s4 1983009808
    %v553 = vunpack.c.0.s8 %v552
    %v554 = vlaneseq
    %v555 = vshrl.u32 %v554, 7
    %v556 = vsub.s32 %v553, %v555
    %v557 = vrot.slane %v550, %v556
    %v558 = vcombine.low %v167, %v191
    %v560 = vunpack.c.l.s4 1983009808
    %v561 = vunpack.c.0.s8 %v560
    %v562 = vlaneseq
    %v563 = vshrl.u32 %v562, 7
    %v564 = vsub.s32 %v561, %v563
    %v565 = vrot.slane %v558, %v564
    %v566 = vcombine.low %v541, %v549
    %v567 = vcombine.high %v541, %v549
    %v569 = vunpack.c.l.s4 1934713408
    %v570 = vunpack.c.0.s8 %v569
    %v571 = vlaneseq
    %v572 = vshrl.u32 %v571, 7
    %v573 = vsub.s32 %v570, %v572
    %v574 = vrot.slane %v566, %v573
    %v576 = vunpack.c.l.s4 1934713408
    %v577 = vunpack.c.0.s8 %v576
    %v578 = vlaneseq
    %v579 = vshrl.u32 %v578, 7
    %v580 = vsub.s32 %v577, %v579
    %v581 = vrot.slane %v567, %v580
    %v582 = vcombine.low %v557, %v565
    %v583 = vcombine.high %v557, %v565
    %v585 = vunpack.c.l.s4 1934713408
    %v586 = vunpack.c.0.s8 %v585
    %v587 = vlaneseq
    %v588 = vshrl.u32 %v587, 7
    %v589 = vsub.s32 %v586, %v588
    %v590 = vrot.slane %v582, %v589
    %v592 = vunpack.c.l.s4 1934713408
    %v593 = vunpack.c.0.s8 %v592
    %v594 = vlaneseq
    %v595 = vshrl.u32 %v594, 7
    %v596 = vsub.s32 %v593, %v595
    %v597 = vrot.slane %v583, %v596
    %v598 = vcombine.low %v574, %v590
    %v599 = vcombine.high %v574, %v590
    %v600 = vcombine.low %v581, %v597
    %v601 = vcombine.high %v581, %v597
    %v604 = vpack.i.b16 %v458, %v322
    %v605 = vshrl.u32 %v322, 16
    %v606 = vshrl.u32 %v458, 16
    %v607 = vpack.i.b16 %v606, %v605
    %v610 = vpack.i.b16 %v459, %v323
    %v611 = vshrl.u32 %v323, 16
    %v612 = vshrl.u32 %v459, 16
    %v613 = vpack.i.b16 %v612, %v611
    %v616 = vpack.i.b16 %v460, %v324
    %v617 = vshrl.u32 %v324, 16
    %v618 = vshrl.u32 %v460, 16
    %v619 = vpack.i.b16 %v618, %v617
    %v622 = vpack.i.b16 %v461, %v325
    %v623 = vshrl.u32 %v325, 16
    %v624 = vshrl.u32 %v461, 16
    %v625 = vpack.i.b16 %v624, %v623
    %v628 = vpack.i.b16 %v462, %v326
    %v629 = vshrl.u32 %v326, 16
    %v630 = vshrl.u32 %v462, 16
    %v631 = vpack.i.b16 %v630, %v629
    %v634 = vpack.i.b16 %v463, %v327
    %v635 = vshrl.u32 %v327, 16
    %v636 = vshrl.u32 %v463, 16
    %v637 = vpack.i.b16 %v636, %v635
    %v640 = vpack.i.b16 %v464, %v328
    %v641 = vshrl.u32 %v328, 16
    %v642 = vshrl.u32 %v464, 16
    %v643 = vpack.i.b16 %v642, %v641
    %v646 = vpack.i.b16 %v465, %v329
    %v647 = vshrl.u32 %v329, 16
    %v648 = vshrl.u32 %v465, 16
    %v649 = vpack.i.b16 %v648, %v647
    %v652 = vpack.i.b16 %v598, %v530
    %v653 = vshrl.u32 %v530, 16
    %v654 = vshrl.u32 %v598, 16
    %v655 = vpack.i.b16 %v654, %v653
    %v658 = vpack.i.b16 %v599, %v531
    %v659 = vshrl.u32 %v531, 16
    %v660 = vshrl.u32 %v599, 16
    %v661 = vpack.i.b16 %v660, %v659
    %v664 = vpack.i.b16 %v600, %v532
    %v665 = vshrl.u32 %v532, 16
    %v666 = vshrl.u32 %v600, 16
    %v667 = vpack.i.b16 %v666, %v665
    %v670 = vpack.i.b16 %v601, %v533
    %v671 = vshrl.u32 %v533, 16
    %v672 = vshrl.u32 %v601, 16
    %v673 = vpack.i.b16 %v672, %v671
    %v676 = vpack.i.b16 %v607, %v604
    %v678 = vshrl.u32 %v604, 16
    %v679 = vshrl.u32 %v607, 16
    %v680 = vpack.i.b16 %v679, %v678
    %v684 = vpack.i.b16 %v613, %v610
    %v686 = vshrl.u32 %v610, 16
    %v687 = vshrl.u32 %v613, 16
    %v688 = vpack.i.b16 %v687, %v686
    %v692 = vpack.i.b16 %v619, %v616
    %v694 = vshrl.u32 %v616, 16
    %v695 = vshrl.u32 %v619, 16
    %v696 = vpack.i.b16 %v695, %v694
    %v700 = vpack.i.b16 %v625, %v622
    %v702 = vshrl.u32 %v622, 16
    %v703 = vshrl.u32 %v625, 16
    %v704 = vpack.i.b16 %v703, %v702
    %v708 = vpack.i.b16 %v631, %v628
    %v710 = vshrl.u32 %v628, 16
    %v711 = vshrl.u32 %v631, 16
    %v712 = vpack.i.b16 %v711, %v710
    %v716 = vpack.i.b16 %v637, %v634
    %v718 = vshrl.u32 %v634, 16
    %v719 = vshrl.u32 %v637, 16
    %v720 = vpack.i.b16 %v719, %v718
    %v724 = vpack.i.b16 %v643, %v640
    %v726 = vshrl.u32 %v640, 16
    %v727 = vshrl.u32 %v643, 16
    %v728 = vpack.i.b16 %v727, %v726
    %v732 = vpack.i.b16 %v649, %v646
    %v734 = vshrl.u32 %v646, 16
    %v735 = vshrl.u32 %v649, 16
    %v736 = vpack.i.b16 %v735, %v734
    %v740 = vpack.i.b16 %v655, %v652
    %v742 = vshrl.u32 %v652, 16
    %v743 = vshrl.u32 %v655, 16
    %v744 = vpack.i.b16 %v743, %v742
    %v748 = vpack.i.b16 %v661, %v658
    %v750 = vshrl.u32 %v658, 16
    %v751 = vshrl.u32 %v661, 16
    %v752 = vpack.i.b16 %v751, %v750
    %v756 = vpack.i.b16 %v667, %v664
    %v758 = vshrl.u32 %v664, 16
    %v759 = vshrl.u32 %v667, 16
    %v760 = vpack.i.b16 %v759, %v758
    %v764 = vpack.i.b16 %v673, %v670
    %v766 = vshrl.u32 %v670, 16
    %v767 = vshrl.u32 %v673, 16
    %v768 = vpack.i.b16 %v767, %v766
    %v770 = vcombine.low %v676, %v692
    %v771 = vcombine.high %v676, %v692
    %v773 = vunpack.c.l.s4 1983009808
    %v774 = vunpack.c.0.s8 %v773
    %v775 = vlaneseq
    %v776 = vshrl.u32 %v775, 7
    %v777 = vsub.s32 %v774, %v776
    %v778 = vrot.slane %v770, %v777
    %v780 = vunpack.c.l.s4 1983009808
    %v781 = vunpack.c.0.s8 %v780
    %v782 = vlaneseq
    %v783 = vshrl.u32 %v782, 7
    %v784 = vsub.s32 %v781, %v783
    %v785 = vrot.slane %v771, %v784
    %v786 = vcombine.low %v684, %v700
    %v787 = vcombine.high %v684, %v700
    %v789 = vunpack.c.l.s4 1983009808
    %v790 = vunpack.c.0.s8 %v789
    %v791 = vlaneseq
    %v792 = vshrl.u32 %v791, 7
    %v793 = vsub.s32 %v790, %v792
    %v794 = vrot.slane %v786, %v793
    %v796 = vunpack.c.l.s4 1983009808
    %v797 = vunpack.c.0.s8 %v796
    %v798 = vlaneseq
    %v799 = vshrl.u32 %v798, 7
    %v800 = vsub.s32 %v797, %v799
    %v801 = vrot.slane %v787, %v800
    %v802 = vcombine.low %v778, %v794
    %v803 = vcombine.high %v778, %v794
    %v805 = vunpack.c.l.s4 1934713408
    %v806 = vunpack.c.0.s8 %v805
    %v807 = vlaneseq
    %v808 = vshrl.u32 %v807, 7
    %v809 = vsub.s32 %v806, %v808
    %v810 = vrot.slane %v802, %v809
    %v812 = vunpack.c.l.s4 1934713408
    %v813 = vunpack.c.0.s8 %v812
    %v814 = vlaneseq
    %v815 = vshrl.u32 %v814, 7
    %v816 = vsub.s32 %v813, %v815
    %v817 = vrot.slane %v803, %v816
    %v818 = vcombine.low %v785, %v801
    %v819 = vcombine.high %v785, %v801
    %v821 = vunpack.c.l.s4 1934713408
    %v822 = vunpack.c.0.s8 %v821
    %v823 = vlaneseq
    %v824 = vshrl.u32 %v823, 7
    %v825 = vsub.s32 %v822, %v824
    %v826 = vrot.slane %v818, %v825
    %v828 = vunpack.c.l.s4 1934713408
    %v829 = vunpack.c.0.s8 %v828
    %v830 = vlaneseq
    %v831 = vshrl.u32 %v830, 7
    %v832 = vsub.s32 %v829, %v831
    %v833 = vrot.slane %v819, %v832
    %v834 = vcombine.high %v810, 0
    %v835 = vcombine.high %v817, 0
    %v836 = vcombine.high %v826, 0
    %v837 = vcombine.high %v833, 0
    %v838 = vcombine.low %v680, %v696
    %v839 = vcombine.high %v680, %v696
    %v841 = vunpack.c.l.s4 1983009808
    %v842 = vunpack.c.0.s8 %v841
    %v843 = vlaneseq
    %v844 = vshrl.u32 %v843, 7
    %v845 = vsub.s32 %v842, %v844
    %v846 = vrot.slane %v838, %v845
    %v848 = vunpack.c.l.s4 1983009808
    %v849 = vunpack.c.0.s8 %v848
    %v850 = vlaneseq
    %v851 = vshrl.u32 %v850, 7
    %v852 = vsub.s32 %v849, %v851
    %v853 = vrot.slane %v839, %v852
    %v854 = vcombine.low %v688, %v704
    %v855 = vcombine.high %v688, %v704
    %v857 = vunpack.c.l.s4 1983009808
    %v858 = vunpack.c.0.s8 %v857
    %v859 = vlaneseq
    %v860 = vshrl.u32 %v859, 7
    %v861 = vsub.s32 %v858, %v860
    %v862 = vrot.slane %v854, %v861
    %v864 = vunpack.c.l.s4 1983009808
    %v865 = vunpack.c.0.s8 %v864
    %v866 = vlaneseq
    %v867 = vshrl.u32 %v866, 7
    %v868 = vsub.s32 %v865, %v867
    %v869 = vrot.slane %v855, %v868
    %v870 = vcombine.low %v846, %v862
    %v871 = vcombine.high %v846, %v862
    %v873 = vunpack.c.l.s4 1934713408
    %v874 = vunpack.c.0.s8 %v873
    %v875 = vlaneseq
    %v876 = vshrl.u32 %v875, 7
    %v877 = vsub.s32 %v874, %v876
    %v878 = vrot.slane %v870, %v877
    %v880 = vunpack.c.l.s4 1934713408
    %v881 = vunpack.c.0.s8 %v880
    %v882 = vlaneseq
    %v883 = vshrl.u32 %v882, 7
    %v884 = vsub.s32 %v881, %v883
    %v885 = vrot.slane %v871, %v884
    %v886 = vcombine.low %v853, %v869
    %v887 = vcombine.high %v853, %v869
    %v889 = vunpack.c.l.s4 1934713408
    %v890 = vunpack.c.0.s8 %v889
    %v891 = vlaneseq
    %v892 = vshrl.u32 %v891, 7
    %v893 = vsub.s32 %v890, %v892
    %v894 = vrot.slane %v886, %v893
    %v896 = vunpack.c.l.s4 1934713408
    %v897 = vunpack.c.0.s8 %v896
    %v898 = vlaneseq
    %v899 = vshrl.u32 %v898, 7
    %v900 = vsub.s32 %v897, %v899
    %v901 = vrot.slane %v887, %v900
    %v902 = vcombine.high %v878, 0
    %v903 = vcombine.high %v885, 0
    %v904 = vcombine.high %v894, 0
    %v905 = vcombine.high %v901, 0
    %v906 = vcombine.low %v708, %v724
    %v907 = vcombine.high %v708, %v724
    %v909 = vunpack.c.l.s4 1983009808
    %v910 = vunpack.c.0.s8 %v909
    %v911 = vlaneseq
    %v912 = vshrl.u32 %v911, 7
    %v913 = vsub.s32 %v910, %v912
    %v914 = vrot.slane %v906, %v913
    %v916 = vunpack.c.l.s4 1983009808
    %v917 = vunpack.c.0.s8 %v916
    %v918 = vlaneseq
    %v919 = vshrl.u32 %v918, 7
    %v920 = vsub.s32 %v917, %v919
    %v921 = vrot.slane %v907, %v920
    %v922 = vcombine.low %v716, %v732
    %v923 = vcombine.high %v716, %v732
    %v925 = vunpack.c.l.s4 1983009808
    %v926 = vunpack.c.0.s8 %v925
    %v927 = vlaneseq
    %v928 = vshrl.u32 %v927, 7
    %v929 = vsub.s32 %v926, %v928
    %v930 = vrot.slane %v922, %v929
    %v932 = vunpack.c.l.s4 1983009808
    %v933 = vunpack.c.0.s8 %v932
    %v934 = vlaneseq
    %v935 = vshrl.u32 %v934, 7
    %v936 = vsub.s32 %v933, %v935
    %v937 = vrot.slane %v923, %v936
    %v938 = vcombine.low %v914, %v930
    %v939 = vcombine.high %v914, %v930
    %v941 = vunpack.c.l.s4 1934713408
    %v942 = vunpack.c.0.s8 %v941
    %v943 = vlaneseq
    %v944 = vshrl.u32 %v943, 7
    %v945 = vsub.s32 %v942, %v944
    %v946 = vrot.slane %v938, %v945
    %v948 = vunpack.c.l.s4 1934713408
    %v949 = vunpack.c.0.s8 %v948
    %v950 = vlaneseq
    %v951 = vshrl.u32 %v950, 7
    %v952 = vsub.s32 %v949, %v951
    %v953 = vrot.slane %v939, %v952
    %v954 = vcombine.low %v921, %v937
    %v955 = vcombine.high %v921, %v937
    %v957 = vunpack.c.l.s4 1934713408
    %v958 = vunpack.c.0.s8 %v957
    %v959 = vlaneseq
    %v960 = vshrl.u32 %v959, 7
    %v961 = vsub.s32 %v958, %v960
    %v962 = vrot.slane %v954, %v961
    %v964 = vunpack.c.l.s4 1934713408
    %v965 = vunpack.c.0.s8 %v964
    %v966 = vlaneseq
    %v967 = vshrl.u32 %v966, 7
    %v968 = vsub.s32 %v965, %v967
    %v969 = vrot.slane %v955, %v968
    %v970 = vcombine.high %v946, 0
    %v971 = vcombine.high %v953, 0
    %v972 = vcombine.high %v962, 0
    %v973 = vcombine.high %v969, 0
    %v974 = vcombine.low %v712, %v728
    %v975 = vcombine.high %v712, %v728
    %v977 = vunpack.c.l.s4 1983009808
    %v978 = vunpack.c.0.s8 %v977
    %v979 = vlaneseq
    %v980 = vshrl.u32 %v979, 7
    %v981 = vsub.s32 %v978, %v980
    %v982 = vrot.slane %v974, %v981
    %v984 = vunpack.c.l.s4 1983009808
    %v985 = vunpack.c.0.s8 %v984
    %v986 = vlaneseq
    %v987 = vshrl.u32 %v986, 7
    %v988 = vsub.s32 %v985, %v987
    %v989 = vrot.slane %v975, %v988
    %v990 = vcombine.low %v720, %v736
    %v991 = vcombine.high %v720, %v736
    %v993 = vunpack.c.l.s4 1983009808
    %v994 = vunpack.c.0.s8 %v993
    %v995 = vlaneseq
    %v996 = vshrl.u32 %v995, 7
    %v997 = vsub.s32 %v994, %v996
    %v998 = vrot.slane %v990, %v997
    %v1000 = vunpack.c.l.s4 1983009808
    %v1001 = vunpack.c.0.s8 %v1000
    %v1002 = vlaneseq
    %v1003 = vshrl.u32 %v1002, 7
    %v1004 = vsub.s32 %v1001, %v1003
    %v1005 = vrot.slane %v991, %v1004
    %v1006 = vcombine.low %v982, %v998
    %v1007 = vcombine.high %v982, %v998
    %v1009 = vunpack.c.l.s4 1934713408
    %v1010 = vunpack.c.0.s8 %v1009
    %v1011 = vlaneseq
    %v1012 = vshrl.u32 %v1011, 7
    %v1013 = vsub.s32 %v1010, %v1012
    %v1014 = vrot.slane %v1006, %v1013
    %v1016 = vunpack.c.l.s4 1934713408
    %v1017 = vunpack.c.0.s8 %v1016
    %v1018 = vlaneseq
    %v1019 = vshrl.u32 %v1018, 7
    %v1020 = vsub.s32 %v1017, %v1019
    %v1021 = vrot.slane %v1007, %v1020
    %v1022 = vcombine.low %v989, %v1005
    %v1023 = vcombine.high %v989, %v1005
    %v1025 = vunpack.c.l.s4 1934713408
    %v1026 = vunpack.c.0.s8 %v1025
    %v1027 = vlaneseq
    %v1028 = vshrl.u32 %v1027, 7
    %v1029 = vsub.s32 %v1026, %v1028
    %v1030 = vrot.slane %v1022, %v1029
    %v1032 = vunpack.c.l.s4 1934713408
    %v1033 = vunpack.c.0.s8 %v1032
    %v1034 = vlaneseq
    %v1035 = vshrl.u32 %v1034, 7
    %v1036 = vsub.s32 %v1033, %v1035
    %v1037 = vrot.slane %v1023, %v1036
    %v1038 = vcombine.high %v1014, 0
    %v1039 = vcombine.high %v1021, 0
    %v1040 = vcombine.high %v1030, 0
    %v1041 = vcombine.high %v1037, 0
    %v1042 = vcombine.low %v740, %v756
    %v1043 = vcombine.high %v740, %v756
    %v1045 = vunpack.c.l.s4 1983009808
    %v1046 = vunpack.c.0.s8 %v1045
    %v1047 = vlaneseq
    %v1048 = vshrl.u32 %v1047, 7
    %v1049 = vsub.s32 %v1046, %v1048
    %v1050 = vrot.slane %v1042, %v1049
    %v1052 = vunpack.c.l.s4 1983009808
    %v1053 = vunpack.c.0.s8 %v1052
    %v1054 = vlaneseq
    %v1055 = vshrl.u32 %v1054, 7
    %v1056 = vsub.s32 %v1053, %v1055
    %v1057 = vrot.slane %v1043, %v1056
    %v1058 = vcombine.low %v748, %v764
    %v1059 = vcombine.high %v748, %v764
    %v1061 = vunpack.c.l.s4 1983009808
    %v1062 = vunpack.c.0.s8 %v1061
    %v1063 = vlaneseq
    %v1064 = vshrl.u32 %v1063, 7
    %v1065 = vsub.s32 %v1062, %v1064
    %v1066 = vrot.slane %v1058, %v1065
    %v1068 = vunpack.c.l.s4 1983009808
    %v1069 = vunpack.c.0.s8 %v1068
    %v1070 = vlaneseq
    %v1071 = vshrl.u32 %v1070, 7
    %v1072 = vsub.s32 %v1069, %v1071
    %v1073 = vrot.slane %v1059, %v1072
    %v1074 = vcombine.low %v1050, %v1066
    %v1075 = vcombine.high %v1050, %v1066
    %v1077 = vunpack.c.l.s4 1934713408
    %v1078 = vunpack.c.0.s8 %v1077
    %v1079 = vlaneseq
    %v1080 = vshrl.u32 %v1079, 7
    %v1081 = vsub.s32 %v1078, %v1080
    %v1082 = vrot.slane %v1074, %v1081
    %v1084 = vunpack.c.l.s4 1934713408
    %v1085 = vunpack.c.0.s8 %v1084
    %v1086 = vlaneseq
    %v1087 = vshrl.u32 %v1086, 7
    %v1088 = vsub.s32 %v1085, %v1087
    %v1089 = vrot.slane %v1075, %v1088
    %v1090 = vcombine.low %v1057, %v1073
    %v1091 = vcombine.high %v1057, %v1073
    %v1093 = vunpack.c.l.s4 1934713408
    %v1094 = vunpack.c.0.s8 %v1093
    %v1095 = vlaneseq
    %v1096 = vshrl.u32 %v1095, 7
    %v1097 = vsub.s32 %v1094, %v1096
    %v1098 = vrot.slane %v1090, %v1097
    %v1100 = vunpack.c.l.s4 1934713408
    %v1101 = vunpack.c.0.s8 %v1100
    %v1102 = vlaneseq
    %v1103 = vshrl.u32 %v1102, 7
    %v1104 = vsub.s32 %v1101, %v1103
    %v1105 = vrot.slane %v1091, %v1104
    %v1106 = vcombine.high %v1082, 0
    %v1107 = vcombine.high %v1089, 0
    %v1108 = vcombine.high %v1098, 0
    %v1109 = vcombine.high %v1105, 0
    %v1110 = vcombine.low %v744, %v760
    %v1111 = vcombine.high %v744, %v760
    %v1113 = vunpack.c.l.s4 1983009808
    %v1114 = vunpack.c.0.s8 %v1113
    %v1115 = vlaneseq
    %v1116 = vshrl.u32 %v1115, 7
    %v1117 = vsub.s32 %v1114, %v1116
    %v1118 = vrot.slane %v1110, %v1117
    %v1120 = vunpack.c.l.s4 1983009808
    %v1121 = vunpack.c.0.s8 %v1120
    %v1122 = vlaneseq
    %v1123 = vshrl.u32 %v1122, 7
    %v1124 = vsub.s32 %v1121, %v1123
    %v1125 = vrot.slane %v1111, %v1124
    %v1126 = vcombine.low %v752, %v768
    %v1127 = vcombine.high %v752, %v768
    %v1129 = vunpack.c.l.s4 1983009808
    %v1130 = vunpack.c.0.s8 %v1129
    %v1131 = vlaneseq
    %v1132 = vshrl.u32 %v1131, 7
    %v1133 = vsub.s32 %v1130, %v1132
    %v1134 = vrot.slane %v1126, %v1133
    %v1136 = vunpack.c.l.s4 1983009808
    %v1137 = vunpack.c.0.s8 %v1136
    %v1138 = vlaneseq
    %v1139 = vshrl.u32 %v1138, 7
    %v1140 = vsub.s32 %v1137, %v1139
    %v1141 = vrot.slane %v1127, %v1140
    %v1142 = vcombine.low %v1118, %v1134
    %v1143 = vcombine.high %v1118, %v1134
    %v1145 = vunpack.c.l.s4 1934713408
    %v1146 = vunpack.c.0.s8 %v1145
    %v1147 = vlaneseq
    %v1148 = vshrl.u32 %v1147, 7
    %v1149 = vsub.s32 %v1146, %v1148
    %v1150 = vrot.slane %v1142, %v1149
    %v1152 = vunpack.c.l.s4 1934713408
    %v1153 = vunpack.c.0.s8 %v1152
    %v1154 = vlaneseq
    %v1155 = vshrl.u32 %v1154, 7
    %v1156 = vsub.s32 %v1153, %v1155
    %v1157 = vrot.slane %v1143, %v1156
    %v1158 = vcombine.low %v1125, %v1141
    %v1159 = vcombine.high %v1125, %v1141
    %v1161 = vunpack.c.l.s4 1934713408
    %v1162 = vunpack.c.0.s8 %v1161
    %v1163 = vlaneseq
    %v1164 = vshrl.u32 %v1163, 7
    %v1165 = vsub.s32 %v1162, %v1164
    %v1166 = vrot.slane %v1158, %v1165
    %v1168 = vunpack.c.l.s4 1934713408
    %v1169 = vunpack.c.0.s8 %v1168
    %v1170 = vlaneseq
    %v1171 = vshrl.u32 %v1170, 7
    %v1172 = vsub.s32 %v1169, %v1171
    %v1173 = vrot.slane %v1159, %v1172
    %v1174 = vcombine.high %v1150, 0
    %v1175 = vcombine.high %v1157, 0
    %v1176 = vcombine.high %v1166, 0
    %v1177 = vcombine.high %v1173, 0
    %v1178 = vcombine.low %v810, %v817
    %v1180 = vunpack.c.l.s4 1983009808
    %v1181 = vunpack.c.0.s8 %v1180
    %v1182 = vlaneseq
    %v1183 = vshrl.u32 %v1182, 7
    %v1184 = vsub.s32 %v1181, %v1183
    %v1185 = vrot.slane %v1178, %v1184
    %v1186 = vcombine.low %v834, %v835
    %v1188 = vunpack.c.l.s4 1983009808
    %v1189 = vunpack.c.0.s8 %v1188
    %v1190 = vlaneseq
    %v1191 = vshrl.u32 %v1190, 7
    %v1192 = vsub.s32 %v1189, %v1191
    %v1193 = vrot.slane %v1186, %v1192
    %v1194 = vcombine.low %v826, %v833
    %v1196 = vunpack.c.l.s4 1983009808
    %v1197 = vunpack.c.0.s8 %v1196
    %v1198 = vlaneseq
    %v1199 = vshrl.u32 %v1198, 7
    %v1200 = vsub.s32 %v1197, %v1199
    %v1201 = vrot.slane %v1194, %v1200
    %v1202 = vcombine.low %v836, %v837
    %v1204 = vunpack.c.l.s4 1983009808
    %v1205 = vunpack.c.0.s8 %v1204
    %v1206 = vlaneseq
    %v1207 = vshrl.u32 %v1206, 7
    %v1208 = vsub.s32 %v1205, %v1207
    %v1209 = vrot.slane %v1202, %v1208
    %v1210 = vcombine.low %v1185, %v1193
    %v1211 = vcombine.high %v1185, %v1193
    %v1213 = vunpack.c.l.s4 1934713408
    %v1214 = vunpack.c.0.s8 %v1213
    %v1215 = vlaneseq
    %v1216 = vshrl.u32 %v1215, 7
    %v1217 = vsub.s32 %v1214, %v1216
    %v1218 = vrot.slane %v1210, %v1217
    %v1220 = vunpack.c.l.s4 1934713408
    %v1221 = vunpack.c.0.s8 %v1220
    %v1222 = vlaneseq
    %v1223 = vshrl.u32 %v1222, 7
    %v1224 = vsub.s32 %v1221, %v1223
    %v1225 = vrot.slane %v1211, %v1224
    %v1226 = vcombine.low %v1201, %v1209
    %v1227 = vcombine.high %v1201, %v1209
    %v1229 = vunpack.c.l.s4 1934713408
    %v1230 = vunpack.c.0.s8 %v1229
    %v1231 = vlaneseq
    %v1232 = vshrl.u32 %v1231, 7
    %v1233 = vsub.s32 %v1230, %v1232
    %v1234 = vrot.slane %v1226, %v1233
    %v1236 = vunpack.c.l.s4 1934713408
    %v1237 = vunpack.c.0.s8 %v1236
    %v1238 = vlaneseq
    %v1239 = vshrl.u32 %v1238, 7
    %v1240 = vsub.s32 %v1237, %v1239
    %v1241 = vrot.slane %v1227, %v1240
    %v1242 = vcombine.low %v1218, %v1234
    %v1243 = vcombine.high %v1218, %v1234
    %v1244 = vcombine.low %v1225, %v1241
    %v1245 = vcombine.high %v1225, %v1241
    %v1246 = vcombine.low %v878, %v885
    %v1248 = vunpack.c.l.s4 1983009808
    %v1249 = vunpack.c.0.s8 %v1248
    %v1250 = vlaneseq
    %v1251 = vshrl.u32 %v1250, 7
    %v1252 = vsub.s32 %v1249, %v1251
    %v1253 = vrot.slane %v1246, %v1252
    %v1254 = vcombine.low %v902, %v903
    %v1256 = vunpack.c.l.s4 1983009808
    %v1257 = vunpack.c.0.s8 %v1256
    %v1258 = vlaneseq
    %v1259 = vshrl.u32 %v1258, 7
    %v1260 = vsub.s32 %v1257, %v1259
    %v1261 = vrot.slane %v1254, %v1260
    %v1262 = vcombine.low %v894, %v901
    %v1264 = vunpack.c.l.s4 1983009808
    %v1265 = vunpack.c.0.s8 %v1264
    %v1266 = vlaneseq
    %v1267 = vshrl.u32 %v1266, 7
    %v1268 = vsub.s32 %v1265, %v1267
    %v1269 = vrot.slane %v1262, %v1268
    %v1270 = vcombine.low %v904, %v905
    %v1272 = vunpack.c.l.s4 1983009808
    %v1273 = vunpack.c.0.s8 %v1272
    %v1274 = vlaneseq
    %v1275 = vshrl.u32 %v1274, 7
    %v1276 = vsub.s32 %v1273, %v1275
    %v1277 = vrot.slane %v1270, %v1276
    %v1278 = vcombine.low %v1253, %v1261
    %v1279 = vcombine.high %v1253, %v1261
    %v1281 = vunpack.c.l.s4 1934713408
    %v1282 = vunpack.c.0.s8 %v1281
    %v1283 = vlaneseq
    %v1284 = vshrl.u32 %v1283, 7
    %v1285 = vsub.s32 %v1282, %v1284
    %v1286 = vrot.slane %v1278, %v1285
    %v1288 = vunpack.c.l.s4 1934713408
    %v1289 = vunpack.c.0.s8 %v1288
    %v1290 = vlaneseq
    %v1291 = vshrl.u32 %v1290, 7
    %v1292 = vsub.s32 %v1289, %v1291
    %v1293 = vrot.slane %v1279, %v1292
    %v1294 = vcombine.low %v1269, %v1277
    %v1295 = vcombine.high %v1269, %v1277
    %v1297 = vunpack.c.l.s4 1934713408
    %v1298 = vunpack.c.0.s8 %v1297
    %v1299 = vlaneseq
    %v1300 = vshrl.u32 %v1299, 7
    %v1301 = vsub.s32 %v1298, %v1300
    %v1302 = vrot.slane %v1294, %v1301
    %v1304 = vunpack.c.l.s4 1934713408
    %v1305 = vunpack.c.0.s8 %v1304
    %v1306 = vlaneseq
    %v1307 = vshrl.u32 %v1306, 7
    %v1308 = vsub.s32 %v1305, %v1307
    %v1309 = vrot.slane %v1295, %v1308
    %v1310 = vcombine.low %v1286, %v1302
    %v1311 = vcombine.high %v1286, %v1302
    %v1312 = vcombine.low %v1293, %v1309
    %v1313 = vcombine.high %v1293, %v1309
    %v1314 = vcombine.low %v946, %v953
    %v1316 = vunpack.c.l.s4 1983009808
    %v1317 = vunpack.c.0.s8 %v1316
    %v1318 = vlaneseq
    %v1319 = vshrl.u32 %v1318, 7
    %v1320 = vsub.s32 %v1317, %v1319
    %v1321 = vrot.slane %v1314, %v1320
    %v1322 = vcombine.low %v970, %v971
    %v1324 = vunpack.c.l.s4 1983009808
    %v1325 = vunpack.c.0.s8 %v1324
    %v1326 = vlaneseq
    %v1327 = vshrl.u32 %v1326, 7
    %v1328 = vsub.s32 %v1325, %v1327
    %v1329 = vrot.slane %v1322, %v1328
    %v1330 = vcombine.low %v962, %v969
    %v1332 = vunpack.c.l.s4 1983009808
    %v1333 = vunpack.c.0.s8 %v1332
    %v1334 = vlaneseq
    %v1335 = vshrl.u32 %v1334, 7
    %v1336 = vsub.s32 %v1333, %v1335
    %v1337 = vrot.slane %v1330, %v1336
    %v1338 = vcombine.low %v972, %v973
    %v1340 = vunpack.c.l.s4 1983009808
    %v1341 = vunpack.c.0.s8 %v1340
    %v1342 = vlaneseq
    %v1343 = vshrl.u32 %v1342, 7
    %v1344 = vsub.s32 %v1341, %v1343
    %v1345 = vrot.slane %v1338, %v1344
    %v1346 = vcombine.low %v1321, %v1329
    %v1347 = vcombine.high %v1321, %v1329
    %v1349 = vunpack.c.l.s4 1934713408
    %v1350 = vunpack.c.0.s8 %v1349
    %v1351 = vlaneseq
    %v1352 = vshrl.u32 %v1351, 7
    %v1353 = vsub.s32 %v1350, %v1352
    %v1354 = vrot.slane %v1346, %v1353
    %v1356 = vunpack.c.l.s4 1934713408
    %v1357 = vunpack.c.0.s8 %v1356
    %v1358 = vlaneseq
    %v1359 = vshrl.u32 %v1358, 7
    %v1360 = vsub.s32 %v1357, %v1359
    %v1361 = vrot.slane %v1347, %v1360
    %v1362 = vcombine.low %v1337, %v1345
    %v1363 = vcombine.high %v1337, %v1345
    %v1365 = vunpack.c.l.s4 1934713408
    %v1366 = vunpack.c.0.s8 %v1365
    %v1367 = vlaneseq
    %v1368 = vshrl.u32 %v1367, 7
    %v1369 = vsub.s32 %v1366, %v1368
    %v1370 = vrot.slane %v1362, %v1369
    %v1372 = vunpack.c.l.s4 1934713408
    %v1373 = vunpack.c.0.s8 %v1372
    %v1374 = vlaneseq
    %v1375 = vshrl.u32 %v1374, 7
    %v1376 = vsub.s32 %v1373, %v1375
    %v1377 = vrot.slane %v1363, %v1376
    %v1378 = vcombine.low %v1354, %v1370
    %v1379 = vcombine.high %v1354, %v1370
    %v1380 = vcombine.low %v1361, %v1377
    %v1381 = vcombine.high %v1361, %v1377
    %v1382 = vcombine.low %v1014, %v1021
    %v1384 = vunpack.c.l.s4 1983009808
    %v1385 = vunpack.c.0.s8 %v1384
    %v1386 = vlaneseq
    %v1387 = vshrl.u32 %v1386, 7
    %v1388 = vsub.s32 %v1385, %v1387
    %v1389 = vrot.slane %v1382, %v1388
    %v1390 = vcombine.low %v1038, %v1039
    %v1392 = vunpack.c.l.s4 1983009808
    %v1393 = vunpack.c.0.s8 %v1392
    %v1394 = vlaneseq
    %v1395 = vshrl.u32 %v1394, 7
    %v1396 = vsub.s32 %v1393, %v1395
    %v1397 = vrot.slane %v1390, %v1396
    %v1398 = vcombine.low %v1030, %v1037
    %v1400 = vunpack.c.l.s4 1983009808
    %v1401 = vunpack.c.0.s8 %v1400
    %v1402 = vlaneseq
    %v1403 = vshrl.u32 %v1402, 7
    %v1404 = vsub.s32 %v1401, %v1403
    %v1405 = vrot.slane %v1398, %v1404
    %v1406 = vcombine.low %v1040, %v1041
    %v1408 = vunpack.c.l.s4 1983009808
    %v1409 = vunpack.c.0.s8 %v1408
    %v1410 = vlaneseq
    %v1411 = vshrl.u32 %v1410, 7
    %v1412 = vsub.s32 %v1409, %v1411
    %v1413 = vrot.slane %v1406, %v1412
    %v1414 = vcombine.low %v1389, %v1397
    %v1415 = vcombine.high %v1389, %v1397
    %v1417 = vunpack.c.l.s4 1934713408
    %v1418 = vunpack.c.0.s8 %v1417
    %v1419 = vlaneseq
    %v1420 = vshrl.u32 %v1419, 7
    %v1421 = vsub.s32 %v1418, %v1420
    %v1422 = vrot.slane %v1414, %v1421
    %v1424 = vunpack.c.l.s4 1934713408
    %v1425 = vunpack.c.0.s8 %v1424
    %v1426 = vlaneseq
    %v1427 = vshrl.u32 %v1426, 7
    %v1428 = vsub.s32 %v1425, %v1427
    %v1429 = vrot.slane %v1415, %v1428
    %v1430 = vcombine.low %v1405, %v1413
    %v1431 = vcombine.high %v1405, %v1413
    %v1433 = vunpack.c.l.s4 1934713408
    %v1434 = vunpack.c.0.s8 %v1433
    %v1435 = vlaneseq
    %v1436 = vshrl.u32 %v1435, 7
    %v1437 = vsub.s32 %v1434, %v1436
    %v1438 = vrot.slane %v1430, %v1437
    %v1440 = vunpack.c.l.s4 1934713408
    %v1441 = vunpack.c.0.s8 %v1440
    %v1442 = vlaneseq
    %v1443 = vshrl.u32 %v1442, 7
    %v1444 = vsub.s32 %v1441, %v1443
    %v1445 = vrot.slane %v1431, %v1444
    %v1446 = vcombine.low %v1422, %v1438
    %v1447 = vcombine.high %v1422, %v1438
    %v1448 = vcombine.low %v1429, %v1445
    %v1449 = vcombine.high %v1429, %v1445
    %v1450 = vcombine.low %v1082, %v1089
    %v1452 = vunpack.c.l.s4 1983009808
    %v1453 = vunpack.c.0.s8 %v1452
    %v1454 = vlaneseq
    %v1455 = vshrl.u32 %v1454, 7
    %v1456 = vsub.s32 %v1453, %v1455
    %v1457 = vrot.slane %v1450, %v1456
    %v1458 = vcombine.low %v1106, %v1107
    %v1460 = vunpack.c.l.s4 1983009808
    %v1461 = vunpack.c.0.s8 %v1460
    %v1462 = vlaneseq
    %v1463 = vshrl.u32 %v1462, 7
    %v1464 = vsub.s32 %v1461, %v1463
    %v1465 = vrot.slane %v1458, %v1464
    %v1466 = vcombine.low %v1098, %v1105
    %v1468 = vunpack.c.l.s4 1983009808
    %v1469 = vunpack.c.0.s8 %v1468
    %v1470 = vlaneseq
    %v1471 = vshrl.u32 %v1470, 7
    %v1472 = vsub.s32 %v1469, %v1471
    %v1473 = vrot.slane %v1466, %v1472
    %v1474 = vcombine.low %v1108, %v1109
    %v1476 = vunpack.c.l.s4 1983009808
    %v1477 = vunpack.c.0.s8 %v1476
    %v1478 = vlaneseq
    %v1479 = vshrl.u32 %v1478, 7
    %v1480 = vsub.s32 %v1477, %v1479
    %v1481 = vrot.slane %v1474, %v1480
    %v1482 = vcombine.low %v1457, %v1465
    %v1483 = vcombine.high %v1457, %v1465
    %v1485 = vunpack.c.l.s4 1934713408
    %v1486 = vunpack.c.0.s8 %v1485
    %v1487 = vlaneseq
    %v1488 = vshrl.u32 %v1487, 7
    %v1489 = vsub.s32 %v1486, %v1488
    %v1490 = vrot.slane %v1482, %v1489
    %v1492 = vunpack.c.l.s4 1934713408
    %v1493 = vunpack.c.0.s8 %v1492
    %v1494 = vlaneseq
    %v1495 = vshrl.u32 %v1494, 7
    %v1496 = vsub.s32 %v1493, %v1495
    %v1497 = vrot.slane %v1483, %v1496
    %v1498 = vcombine.low %v1473, %v1481
    %v1499 = vcombine.high %v1473, %v1481
    %v1501 = vunpack.c.l.s4 1934713408
    %v1502 = vunpack.c.0.s8 %v1501
    %v1503 = vlaneseq
    %v1504 = vshrl.u32 %v1503, 7
    %v1505 = vsub.s32 %v1502, %v1504
    %v1506 = vrot.slane %v1498, %v1505
    %v1508 = vunpack.c.l.s4 1934713408
    %v1509 = vunpack.c.0.s8 %v1508
    %v1510 = vlaneseq
    %v1511 = vshrl.u32 %v1510, 7
    %v1512 = vsub.s32 %v1509, %v1511
    %v1513 = vrot.slane %v1499, %v1512
    %v1514 = vcombine.low %v1490, %v1506
    %v1515 = vcombine.high %v1490, %v1506
    %v1516 = vcombine.low %v1497, %v1513
    %v1517 = vcombine.high %v1497, %v1513
    %v1518 = vcombine.low %v1150, %v1157
    %v1520 = vunpack.c.l.s4 1983009808
    %v1521 = vunpack.c.0.s8 %v1520
    %v1522 = vlaneseq
    %v1523 = vshrl.u32 %v1522, 7
    %v1524 = vsub.s32 %v1521, %v1523
    %v1525 = vrot.slane %v1518, %v1524
    %v1526 = vcombine.low %v1174, %v1175
    %v1528 = vunpack.c.l.s4 1983009808
    %v1529 = vunpack.c.0.s8 %v1528
    %v1530 = vlaneseq
    %v1531 = vshrl.u32 %v1530, 7
    %v1532 = vsub.s32 %v1529, %v1531
    %v1533 = vrot.slane %v1526, %v1532
    %v1534 = vcombine.low %v1166, %v1173
    %v1536 = vunpack.c.l.s4 1983009808
    %v1537 = vunpack.c.0.s8 %v1536
    %v1538 = vlaneseq
    %v1539 = vshrl.u32 %v1538, 7
    %v1540 = vsub.s32 %v1537, %v1539
    %v1541 = vrot.slane %v1534, %v1540
    %v1542 = vcombine.low %v1176, %v1177
    %v1544 = vunpack.c.l.s4 1983009808
    %v1545 = vunpack.c.0.s8 %v1544
    %v1546 = vlaneseq
    %v1547 = vshrl.u32 %v1546, 7
    %v1548 = vsub.s32 %v1545, %v1547
    %v1549 = vrot.slane %v1542, %v1548
    %v1550 = vcombine.low %v1525, %v1533
    %v1551 = vcombine.high %v1525, %v1533
    %v1553 = vunpack.c.l.s4 1934713408
    %v1554 = vunpack.c.0.s8 %v1553
    %v1555 = vlaneseq
    %v1556 = vshrl.u32 %v1555, 7
    %v1557 = vsub.s32 %v1554, %v1556
    %v1558 = vrot.slane %v1550, %v1557
    %v1560 = vunpack.c.l.s4 1934713408
    %v1561 = vunpack.c.0.s8 %v1560
    %v1562 = vlaneseq
    %v1563 = vshrl.u32 %v1562, 7
    %v1564 = vsub.s32 %v1561, %v1563
    %v1565 = vrot.slane %v1551, %v1564
    %v1566 = vcombine.low %v1541, %v1549
    %v1567 = vcombine.high %v1541, %v1549
    %v1569 = vunpack.c.l.s4 1934713408
    %v1570 = vunpack.c.0.s8 %v1569
    %v1571 = vlaneseq
    %v1572 = vshrl.u32 %v1571, 7
    %v1573 = vsub.s32 %v1570, %v1572
    %v1574 = vrot.slane %v1566, %v1573
    %v1576 = vunpack.c.l.s4 1934713408
    %v1577 = vunpack.c.0.s8 %v1576
    %v1578 = vlaneseq
    %v1579 = vshrl.u32 %v1578, 7
    %v1580 = vsub.s32 %v1577, %v1579
    %v1581 = vrot.slane %v1567, %v1580
    %v1582 = vcombine.low %v1558, %v1574
    %v1583 = vcombine.high %v1558, %v1574
    %v1584 = vcombine.low %v1565, %v1581
    %v1585 = vcombine.high %v1565, %v1581
    %v1588 = vpack.i.b16 %v1310, %v1242
    %v1589 = vshrl.u32 %v1242, 16
    %v1590 = vshrl.u32 %v1310, 16
    %v1591 = vpack.i.b16 %v1590, %v1589
    %v1594 = vpack.i.b16 %v1311, %v1243
    %v1595 = vshrl.u32 %v1243, 16
    %v1596 = vshrl.u32 %v1311, 16
    %v1597 = vpack.i.b16 %v1596, %v1595
    %v1600 = vpack.i.b16 %v1312, %v1244
    %v1601 = vshrl.u32 %v1244, 16
    %v1602 = vshrl.u32 %v1312, 16
    %v1603 = vpack.i.b16 %v1602, %v1601
    %v1606 = vpack.i.b16 %v1313, %v1245
    %v1607 = vshrl.u32 %v1245, 16
    %v1608 = vshrl.u32 %v1313, 16
    %v1609 = vpack.i.b16 %v1608, %v1607
    %v1612 = vpack.i.b16 %v1446, %v1378
    %v1613 = vshrl.u32 %v1378, 16
    %v1614 = vshrl.u32 %v1446, 16
    %v1615 = vpack.i.b16 %v1614, %v1613
    %v1618 = vpack.i.b16 %v1447, %v1379
    %v1619 = vshrl.u32 %v1379, 16
    %v1620 = vshrl.u32 %v1447, 16
    %v1621 = vpack.i.b16 %v1620, %v1619
    %v1624 = vpack.i.b16 %v1448, %v1380
    %v1625 = vshrl.u32 %v1380, 16
    %v1626 = vshrl.u32 %v1448, 16
    %v1627 = vpack.i.b16 %v1626, %v1625
    %v1630 = vpack.i.b16 %v1449, %v1381
    %v1631 = vshrl.u32 %v1381, 16
    %v1632 = vshrl.u32 %v1449, 16
    %v1633 = vpack.i.b16 %v1632, %v1631
    %v1636 = vpack.i.b16 %v1582, %v1514
    %v1637 = vshrl.u32 %v1514, 16
    %v1638 = vshrl.u32 %v1582, 16
    %v1639 = vpack.i.b16 %v1638, %v1637
    %v1642 = vpack.i.b16 %v1583, %v1515
    %v1643 = vshrl.u32 %v1515, 16
    %v1644 = vshrl.u32 %v1583, 16
    %v1645 = vpack.i.b16 %v1644, %v1643
    %v1648 = vpack.i.b16 %v1584, %v1516
    %v1649 = vshrl.u32 %v1516, 16
    %v1650 = vshrl.u32 %v1584, 16
    %v1651 = vpack.i.b16 %v1650, %v1649
    %v1654 = vpack.i.b16 %v1585, %v1517
    %v1655 = vshrl.u32 %v1517, 16
    %v1656 = vshrl.u32 %v1585, 16
    %v1657 = vpack.i.b16 %v1656, %v1655
    %1658 = vrot.lane.b32.xlu0 %v1591, 16
    %v1659 = vpop.permute.xlu0 %1658
    %1660 = vrot.lane.b32.xlu0 %v1615, 16
    %v1661 = vpop.permute.xlu0 %1660
    %1662 = vrot.lane.b32.xlu0 %v1639, 16
    %v1663 = vpop.permute.xlu0 %1662
    %1664 = vrot.lane.b32.xlu0 %v1594, 32
    %v1665 = vpop.permute.xlu0 %1664
    %1666 = vrot.lane.b32.xlu0 %v1618, 32
    %v1667 = vpop.permute.xlu0 %1666
    %1668 = vrot.lane.b32.xlu0 %v1642, 32
    %v1669 = vpop.permute.xlu0 %1668
    %1670 = vrot.lane.b32.xlu0 %v1597, 48
    %v1671 = vpop.permute.xlu0 %1670
    %1672 = vrot.lane.b32.xlu0 %v1621, 48
    %v1673 = vpop.permute.xlu0 %1672
    %1674 = vrot.lane.b32.xlu0 %v1645, 48
    %v1675 = vpop.permute.xlu0 %1674
    %1676 = vrot.lane.b32.xlu0 %v1600, 64
    %v1677 = vpop.permute.xlu0 %1676
    %1678 = vrot.lane.b32.xlu0 %v1624, 64
    %v1679 = vpop.permute.xlu0 %1678
    %1680 = vrot.lane.b32.xlu0 %v1648, 64
    %v1681 = vpop.permute.xlu0 %1680
    %1682 = vrot.lane.b32.xlu0 %v1603, 80
    %v1683 = vpop.permute.xlu0 %1682
    %1684 = vrot.lane.b32.xlu0 %v1627, 80
    %v1685 = vpop.permute.xlu0 %1684
    %1686 = vrot.lane.b32.xlu0 %v1651, 80
    %v1687 = vpop.permute.xlu0 %1686
    %1688 = vrot.lane.b32.xlu0 %v1606, 96
    %v1689 = vpop.permute.xlu0 %1688
    %1690 = vrot.lane.b32.xlu0 %v1630, 96
    %v1691 = vpop.permute.xlu0 %1690
    %1692 = vrot.lane.b32.xlu0 %v1654, 96
    %v1693 = vpop.permute.xlu0 %1692
    %1694 = vrot.lane.b32.xlu0 %v1609, 112
    %v1695 = vpop.permute.xlu0 %1694
    %1696 = vrot.lane.b32.xlu0 %v1633, 112
    %v1697 = vpop.permute.xlu0 %1696
    %1698 = vrot.lane.b32.xlu0 %v1657, 112
    %v1699 = vpop.permute.xlu0 %1698
    %vm1700 = vcmask 130048
    %v1703 = vsel %vm1700, %v1588, %v1659
    %v1706 = vsel %vm1700, %v1612, %v1661
    %v1709 = vsel %vm1700, %v1636, %v1663
    %vm1710 = vcmask 261120
    %v1712 = vsel %vm1710, %v1703, %v1665
    %v1714 = vsel %vm1710, %v1706, %v1667
    %v1716 = vsel %vm1710, %v1709, %v1669
    %vm1717 = vcmask 392192
    %v1719 = vsel %vm1717, %v1712, %v1671
    %v1721 = vsel %vm1717, %v1714, %v1673
    %v1723 = vsel %vm1717, %v1716, %v1675
    %vm1724 = vcmask 523264
    %v1726 = vsel %vm1724, %v1719, %v1677
    %v1728 = vsel %vm1724, %v1721, %v1679
    %v1730 = vsel %vm1724, %v1723, %v1681
    %vm1731 = vcmask 654336
    %v1733 = vsel %vm1731, %v1726, %v1683
    %v1735 = vsel %vm1731, %v1728, %v1685
    %v1737 = vsel %vm1731, %v1730, %v1687
    %vm1738 = vcmask 785408
    %v1740 = vsel %vm1738, %v1733, %v1689
    %v1742 = vsel %vm1738, %v1735, %v1691
    %v1744 = vsel %vm1738, %v1737, %v1693
    %vm1745 = vcmask 916480
    %v1747 = vsel %vm1745, %v1740, %v1695
    %v1750 = vsel %vm1745, %v1742, %v1697
    %v1753 = vsel %vm1745, %v1744, %v1699
    %v1755 = vld [vmem:[%s1] sm:$0xf]
    %v1756 = vld [vmem:[%s1 + $0x4] sm:$0xf]
    %v1759 = vunpack.c.l.b16 %v1755
    %v1760 = vunpack.c.l.b16 %v1756
    %v1761 = vpack.c.b16 %v1760, %v1759
    %v1763 = vsel %vm1717, %v1761, 0
    %1765 = vmatprep.subr.bf16.mxu0 0
    %1766 = vmatpush1.bf16.msra.mxu0 %v1747
    %1767 = vmatprep.subr.bf16.mxu0 0
    %1768 = vmatpush1.bf16.msra.mxu0 %v1750
    %1769 = vmatprep.subr.bf16.mxu0 0
    %1770 = vmatpush1.bf16.msra.mxu0 %v1753
    %1771 = vmatprep.subr.bf16.mxu0 0
    %1772 = vmatpush1.bf16.msra.mxu0 0
    %1773 = vmatprep.subr.bf16.mxu0 0
    %1774 = vmatpush1.bf16.msra.mxu0 0
    %1775 = vmatprep.subr.bf16.mxu0 0
    %1776 = vmatpush1.bf16.msra.mxu0 0
    %1777 = vmatprep.subr.bf16.mxu0 0
    %1778 = vmatpush1.bf16.msra.mxu0 0
    %1779 = vmatprep.subr.bf16.mxu0 0
    %1780 = vmatpush1.bf16.msra.mxu0 0
    %1781 = vmatprep.subr.bf16.mxu0 0
    %1782 = vmatpush1.bf16.msra.mxu0 0
    %1783 = vmatprep.subr.bf16.mxu0 0
    %1784 = vmatpush1.bf16.msra.mxu0 0
    %1785 = vmatprep.subr.bf16.mxu0 0
    %1786 = vmatpush1.bf16.msra.mxu0 0
    %1787 = vmatprep.subr.bf16.mxu0 0
    %1788 = vmatpush1.bf16.msra.mxu0 0
    %1789 = vmatprep.subr.bf16.mxu0 0
    %1790 = vmatpush1.bf16.msra.mxu0 0
    %1791 = vmatprep.subr.bf16.mxu0 0
    %1792 = vmatpush1.bf16.msra.mxu0 0
    %1793 = vmatprep.subr.bf16.mxu0 0
    %1794 = vmatpush1.bf16.msra.mxu0 0
    %1795 = vmatprep.subr.bf16.mxu0 0
    %1796 = vmatpush1.bf16.msra.mxu0 0
    %1797 = vmatprep.mubr.bf16.mxu0 0
    %1798 = vmatmul.mubr.bf16.gmra.mrb[0].mxu0 %v1763
    %v1799 = vpop.f32.mrb[0].mxu0
    %v1800 = vadd.f32 0.0, %v1799
    %v1801 = vpop.f32.mrb[0].mxu0
    %v1802 = vpop.f32.mrb[0].mxu0
    %v1803 = vadd.f32 0.0, %v1802
    %v1804 = vpop.f32.mrb[0].mxu0
    %1805 = vdwg.mxu0
    %v1806 = vmax.f32 %v1800, 0.0
    %v1807 = vmax.f32 %v1803, 0.0
    %1808 = vst [vmem:[#allocation2] sm:$0xff] %v1806
    %1809 = vst [vmem:[#allocation2 + $0x8] sm:$0xff] %v1807
    // Predicated region
    $region14: #{tpu_custom_call.1} parent=1 // pred_check
      _
    $region15: #{tpu_custom_call.1} parent=1 // pred_check_branch
      %1811 = sbr.rel (0) target = $region17
    $region16: #{tpu_custom_call.1} parent=1 // pred_region
      %s1813 = ssub.s32 256, 256
      %1814 = vsyncadd [#allocation3], %s1813
      %s1815 = sshll.u32 [#allocation2], 4
      %s1816 = int_to_ptr.vmem [resolvable:$true] %s1815
      %1821 = dma.vmem_to_hbm [thread:$0]  %s1816, 256, %s3, [#allocation3], 128, 128, 8
    $region17: #{tpu_custom_call.1} parent=1 // pred_fallthru
      _
    // Predicated region
    $region18: #{tpu_custom_call.1} parent=1 // pred_check
      _
    $region19: #{tpu_custom_call.1} parent=1 // pred_check_branch
      %1823 = sbr.rel (0) target = $region21
    $region20: #{tpu_custom_call.1} parent=1 // pred_region
      %1824 = dma.done [#allocation3], 256
    $region21: #{tpu_custom_call.1} parent=1 // pred_fallthru
      _
    %1825 = vsyncpa [#allocation3], 1

</llo_original>
